<compile_context>
chip_gen: v7x
topology: tpu7x:2x2x1
jax: 0.10.0
libtpu: 0.0.40
codegen_flags: <defaults>
</compile_context>

<pallas_src>
import functools

import jax
import jax.numpy as jnp
from jax.experimental import pallas as pl
from jax.experimental.pallas import tpu as pltpu


# --------------------------------------------------------------------------- #
# Kernels
# --------------------------------------------------------------------------- #
def _linear_relu_kernel(x_ref, w_ref, b_ref, o_ref):
    """y = relu(x @ W + b) for one output-feature block; full K resident."""
    y = jnp.dot(x_ref[...], w_ref[...], preferred_element_type=jnp.float32)
    o_ref[...] = jnp.maximum(y + b_ref[...], 0.0).astype(o_ref.dtype)


def _linear_relu_acc_kernel(x_ref, w_ref, b_ref, o_ref, acc_ref):
    """K-reduction variant: grid = (N-blocks, K-blocks), K last ("arbitrary")."""
    k = pl.program_id(1)

    @pl.when(k == 0)
    def _():
        acc_ref[...] = jnp.zeros_like(acc_ref)

    acc_ref[...] += jnp.dot(x_ref[...], w_ref[...],
                            preferred_element_type=jnp.float32)

    @pl.when(k == pl.num_programs(1) - 1)
    def _():
        o_ref[...] = jnp.maximum(acc_ref[...] + b_ref[...], 0.0).astype(o_ref.dtype)


# --------------------------------------------------------------------------- #
# Tile / VMEM-budget selection
# --------------------------------------------------------------------------- #
def _vmem_caps():
    """(working-set budget, compiler vmem limit) in bytes, generation-aware."""
    try:
        cap = int(pltpu.get_tpu_info().vmem_capacity_bytes)
    except Exception:
        cap = 64 * 1024 * 1024  # v7x per-TC physical VMEM: safe lower bound everywhere
    budget = int(cap * 0.60)    # leave headroom for compiler scratch / semaphores
    limit = int(cap * 0.75)
    return budget, limit


def _pick_tn_full_k(M, K, N, in_itemsize, budget):
    """Largest lane-dense N tile for the full-K path.

    x has a constant index map (resident, single-buffered); the W / bias / out
    tiles are double-buffered by the pipeline.  Bias and output are f32.
    """
    for tn in (8192, 4096, 2048, 1024, 512, 256, 128):
        if N % tn:
            continue
        working = (M * K * in_itemsize
                   + 2 * (K * tn * in_itemsize + tn * 4 + M * tn * 4))
        if working <= budget:
            return tn
    return None


def _pick_tiles_k_reduction(M, K, N, in_itemsize, budget):
    """(tn, tk) for the K-reduction fallback (large K); prefers wide N tiles."""
    for tn in (2048, 1024, 512, 256, 128):
        if N % tn:
            continue
        for tk in (2048, 1024, 512, 256, 128):
            if K % tk:
                continue
            working = (2 * (M * tk * in_itemsize + tk * tn * in_itemsize
                            + tn * 4 + M * tn * 4)
                       + M * tn * 4)  # + f32 accumulator scratch
            if working <= budget:
                return tn, tk
    return None


# --------------------------------------------------------------------------- #
# Forward
# --------------------------------------------------------------------------- #
@functools.partial(jax.jit, static_argnames=("compute_dtype",))
def simple_nn_forward(x, w, b, *, compute_dtype=jnp.bfloat16):
    """y = relu(x @ w + b) via Pallas.

    x: (M, K) float32
    w: (K, N) float32   (PyTorch nn.Linear weight, transposed)
    b: (N,) or (1, N) float32
    compute_dtype: streaming dtype for x/W (bf16 halves HBM traffic; the MXU
                   accumulation and the bias+ReLU epilogue are always f32).
    """
    M, K = x.shape
    Kw, N = w.shape
    assert Kw == K
    b = b.reshape(1, N).astype(jnp.float32)

    xs = x.astype(compute_dtype)
    ws = w.astype(compute_dtype)
    in_itemsize = jnp.dtype(compute_dtype).itemsize

    budget, vmem_limit = _vmem_caps()
    out_shape = jax.ShapeDtypeStruct((M, N), x.dtype)

    if N % 128 != 0:
        tn = N  # full-extent block is always legal; only tiny layers hit this
    else:
        tn = _pick_tn_full_k(M, K, N, in_itemsize, budget)

    if tn is not None:
        # ---- Fast path: full K per step, fused bias + ReLU epilogue. ---- #
        if tn == N and N % 256 == 0:
            # Split N in two so the "parallel" axis has work for both of
            # v7x's TensorCores; ~one extra 0.35 us grid step on v5e/v6e.
            tn = N // 2
        n_blocks = N // tn

        return pl.pallas_call(
            _linear_relu_kernel,
            out_shape=out_shape,
            grid_spec=pl.GridSpec(
                grid=(n_blocks,),
                in_specs=[
                    pl.BlockSpec((M, K), lambda j: (0, 0)),    # x: resident
                    pl.BlockSpec((K, tn), lambda j: (0, j)),   # W: full rows, contiguous
                    pl.BlockSpec((1, tn), lambda j: (0, j)),   # bias
                ],
                out_specs=pl.BlockSpec((M, tn), lambda j: (0, j)),  # lane-dense store
            ),
            compiler_params=pltpu.CompilerParams(
                dimension_semantics=("parallel",),
                vmem_limit_bytes=vmem_limit,
            ),
        )(xs, ws, b)

    # ---- Fallback for large K: tiled K reduction with f32 accumulator. ---- #
    tiles = _pick_tiles_k_reduction(M, K, N, in_itemsize, budget)
    if tiles is None:
        raise ValueError(
            f"No (tn, tk) tiling fits VMEM for M={M}, K={K}, N={N}."
        )
    tn, tk = tiles

    return pl.pallas_call(
        _linear_relu_acc_kernel,
        out_shape=out_shape,
        grid_spec=pl.GridSpec(
            grid=(N // tn, K // tk),
            in_specs=[
                pl.BlockSpec((M, tk), lambda j, k: (0, k)),
                pl.BlockSpec((tk, tn), lambda j, k: (k, j)),
                pl.BlockSpec((1, tn), lambda j, k: (0, j)),
            ],
            out_specs=pl.BlockSpec((M, tn), lambda j, k: (0, j)),
            scratch_shapes=[pltpu.VMEM((M, tn), jnp.float32)],
        ),
        compiler_params=pltpu.CompilerParams(
            dimension_semantics=("parallel", "arbitrary"),
            vmem_limit_bytes=vmem_limit,
        ),
    )(xs, ws, b)


def init_params(key, in_dim, out_dim):
    """Deterministic init mirroring nn.Linear's default U(-1/sqrt(in), 1/sqrt(in))."""
    kw, kb = jax.random.split(key)
    bound = 1.0 / jnp.sqrt(jnp.float32(in_dim))
    # PyTorch stores weight as (out_dim, in_dim); we keep it transposed: (in_dim, out_dim).
    w = jax.random.uniform(kw, (in_dim, out_dim), jnp.float32, -bound, bound)
    b = jax.random.uniform(kb, (1, out_dim), jnp.float32, -bound, bound)
    return w, b


if __name__ == "__main__":
    in_dim, out_dim = 1024, 512   # SimpleNN defaults
    batch = 8

    key = jax.random.PRNGKey(0)
    kx, kp = jax.random.split(key)
    x = jax.random.normal(kx, (batch, in_dim), jnp.float32)
    w, b = init_params(kp, in_dim, out_dim)

    # Default perf path: bf16-streamed operands, f32 MXU accumulate + epilogue.
    y_bf16 = simple_nn_forward(x, w, b)
    jax.block_until_ready(y_bf16)
    ref_bf16 = jnp.maximum(
        jnp.dot(x.astype(jnp.bfloat16), w.astype(jnp.bfloat16),
                preferred_element_type=jnp.float32) + b, 0.0)
    assert y_bf16.shape == (batch, out_dim)
    assert y_bf16.dtype == jnp.float32
    assert jnp.allclose(y_bf16, ref_bf16, atol=1e-3, rtol=1e-3)

    # Exact-precision path (matches the PyTorch module's f32 semantics).
    y_f32 = simple_nn_forward(x, w, b, compute_dtype=jnp.float32)
    jax.block_until_ready(y_f32)
    ref_f32 = jnp.maximum(x @ w + b, 0.0)
    assert jnp.allclose(y_f32, ref_f32, atol=1e-4, rtol=1e-4)

    print("KERNEL_OK")
</pallas_src>

<mosaic_0001>
module attributes {stable_mosaic.version = 11 : i64} {
  func.func @_linear_relu_kernel(%arg0: i32, %arg1: memref<8x1024xbf16, #tpu.memory_space<vmem>>, %arg2: memref<1024x256xbf16, #tpu.memory_space<vmem>>, %arg3: memref<1x256xf32, #tpu.memory_space<vmem>>, %arg4: memref<8x256xf32, #tpu.memory_space<vmem>>) attributes {dimension_semantics = [#tpu.dimension_semantics<parallel>], iteration_bounds = array<i64: 2>, scalar_prefetch = 0 : i64, scratch_operands = 0 : i64, tpu.core_type = #tpu.core_type<tc>, window_params = [{pipeline_mode = #tpu.pipeline_mode<synchronous>, transform_indices = @transform_0, window_bounds = array<i64: 8, 1024>}, {transform_indices = @transform_1, window_bounds = array<i64: 1024, 256>}, {transform_indices = @transform_2, window_bounds = array<i64: 1, 256>}, {transform_indices = @transform_3, window_bounds = array<i64: 8, 256>}]} {
    %c0 = arith.constant 0 : index
    %c0_0 = arith.constant 0 : index
    %0 = vector.load %arg1[%c0, %c0_0] : memref<8x1024xbf16, #tpu.memory_space<vmem>>, vector<8x1024xbf16>
    %c0_1 = arith.constant 0 : index
    %c0_2 = arith.constant 0 : index
    %1 = vector.load %arg2[%c0_1, %c0_2] : memref<1024x256xbf16, #tpu.memory_space<vmem>>, vector<1024x256xbf16>
    %cst = arith.constant dense<0.000000e+00> : vector<8x256xf32>
    %2 = tpu.matmul %0, %1, %cst {dimension_numbers = #tpu.dot_dimension_numbers<[1], [0], [0], [1], [0, 0, 1, 1], [], []>} : vector<8x1024xbf16>, vector<1024x256xbf16>, vector<8x256xf32> -> vector<8x256xf32>
    %c0_3 = arith.constant 0 : index
    %c0_4 = arith.constant 0 : index
    %3 = vector.load %arg3[%c0_3, %c0_4] : memref<1x256xf32, #tpu.memory_space<vmem>>, vector<1x256xf32>
    %4 = vector.broadcast %3 : vector<1x256xf32> to vector<8x256xf32>
    %5 = arith.addf %2, %4 : vector<8x256xf32>
    %cst_5 = arith.constant 0.000000e+00 : f32
    %6 = vector.broadcast %cst_5 : f32 to vector<8x256xf32>
    %7 = arith.maximumf %5, %6 : vector<8x256xf32>
    %c0_6 = arith.constant 0 : index
    %c0_7 = arith.constant 0 : index
    %8 = vector.load %arg4[%c0_6, %c0_7] : memref<8x256xf32, #tpu.memory_space<vmem>>, vector<8x256xf32>
    tpu.vector_store %arg4[%c0_6, %c0_7], %7 {strides = array<i32>} : memref<8x256xf32, #tpu.memory_space<vmem>>, vector<8x256xf32>,
    return
  }
  func.func @transform_0(%arg0: i32) -> (i32, i32) {
    %c0_i32 = arith.constant 0 : i32
    %c0_i32_0 = arith.constant 0 : i32
    %c0_i32_1 = arith.constant 0 : i32
    return %c0_i32, %c0_i32_0 : i32, i32
  }
  func.func @transform_1(%arg0: i32) -> (i32, i32) {
    %c0_i32 = arith.constant 0 : i32
    %c0_i32_0 = arith.constant 0 : i32
    return %c0_i32, %arg0 : i32, i32
  }
  func.func @transform_2(%arg0: i32) -> (i32, i32) {
    %c0_i32 = arith.constant 0 : i32
    %c0_i32_0 = arith.constant 0 : i32
    return %c0_i32, %arg0 : i32, i32
  }
  func.func @transform_3(%arg0: i32) -> (i32, i32) {
    %c0_i32 = arith.constant 0 : i32
    %c0_i32_0 = arith.constant 0 : i32
    return %c0_i32, %arg0 : i32, i32
  }
}

</mosaic_0001>

<llo_original>
// kernel: simple_nn_forward.1
$region0: #{simple_nn_forward.1}
  #allocation0 [shape = 'u32[]', space=smem, size = 0x4, offset = 0x4, fixed_abs, tag = 'smem constant byte address 0x4 - core index']
  #allocation1 [shape = 'u32[144,128]{1,0:T(1,128)}', space=vmem, size = 0x12000, scoped, tag = 'internal scratch']
  %s0 = inlined_call_operand.vmem [shape: bf16[8,1024], index: 0, kind: input, shape index: {}]
  %s1 = inlined_call_operand.vmem [shape: bf16[1024,512], index: 1, kind: input, shape index: {}]
  %s2 = inlined_call_operand.vmem [shape: f32[1,512], index: 2, kind: input, shape index: {}]
  %s3 = inlined_call_operand.hbm [shape: f32[8,512], index: 3, kind: output, shape index: {}]
  %s4 = sld [smem:[#allocation0]]
  $region83: #{simple_nn_forward.1} parent=0
    _
  %s6 = ssub.s32 1, %s4
  %s7 = scalar_select 0, %s6, %s4
  $region1: #{simple_nn_forward.1} parent=0
    #allocation2 [shape = 'u8[1048576]{0}', space=vmem, size = 0x100000, scoped, tag = 'input window, operand 1']
    #allocation3 [shape = 'u8[16384]{0}', space=vmem, size = 0x4000, scoped, tag = 'output window, operand 0']
    #allocation4 [shape = 's32[2]{0}', space=sflag, size = 0x8, scoped, tag = 'scoped memory for simple_nn_forward.1']
    %8 = vsyncpa [#allocation4], 0
    %s9 = scalar_lea.sflag [#allocation4], 1
    %10 = vsyncpa %s9, 0
    loop: start=0, step=1, limit=4
    $region2: #{simple_nn_forward.1} parent=1 // loop_pre_header
      _
    $region3: #{simple_nn_forward.1} parent=1 // loop_header
      %s12 = sphi 0, %s16
      %p13 = scmp.ge.s32.totalorder %s12, 4
      %s20 = sphi 0, %s20
      %s22 = sphi 0, %s20
      %s23 = sphi 0, %s22
      %s37 = sphi 0, %s23
      %s43 = sphi 0, %s45
      %s46 = sphi 0, %s43
      %s47 = sphi 0, %s46
      %s63 = sphi 0, %s47
      %s69 = sphi 0, %s71
      %s72 = sphi 0, %s69
      %s73 = sphi 0, %s72
      %s89 = sphi 0, %s73
      %s95 = sphi 0, %s97
      %s98 = sphi 0, %s95
      %s99 = sphi 0, %s98
      %s115 = sphi 0, %s99
    $region4: #{simple_nn_forward.1} parent=1 // loop_header_branch
      %15 = sbr.rel (%p13) target = $region8
    $region5: #{simple_nn_forward.1} parent=1 // loop_body
      %s17 = ssub.s32 %s12, 1
      %s18 = ssub.s32 %s12, 2
      %s19 = sadd.s32 %s12, 1
      %s21 = sadd.s32 %s20, 1
      %p24 = scmp.eq.s32.totalorder %s12, 1
      %p25 = scmp.ne.s32.totalorder %s20, %s22
      %p26 = scmp.eq.s32.totalorder %s12, 0
      %p27 = por %p25, %p26
      %p28 = scmp.ne.s32.totalorder %s20, %s22
      %p29 = scmp.eq.s32.totalorder %s17, 1
      %p30 = por %p28, %p29
      %p31 = scmp.ne.s32.totalorder %s22, %s23
      %p32 = scmp.eq.s32.totalorder %s17, 0
      %p33 = por %p31, %p32
      %p34 = scmp.ne.s32.totalorder %s22, %s23
      %p35 = scmp.eq.s32.totalorder %s18, 1
      %p36 = por %p34, %p35
      %p38 = scmp.ne.s32.totalorder %s23, %s37
      %p39 = scmp.eq.s32.totalorder %s18, 0
      %p40 = por %p38, %p39
      %s41 = ssub.s32 %s12, %s19
      %p42 = scmp.eq.s32.totalorder %s41, 0
      %s44 = sadd.s32 %s43, 1
      %s45 = scalar_select %p42, %s43, %s44
      %p48 = pneg %p42
      %p49 = scmp.eq.s32.totalorder %s12, 1
      %p50 = por %p48, %p49
      %p51 = scmp.ne.s32.totalorder %s43, %s46
      %p52 = scmp.eq.s32.totalorder %s12, 0
      %p53 = por %p51, %p52
      %p54 = scmp.ne.s32.totalorder %s43, %s46
      %p55 = scmp.eq.s32.totalorder %s17, 1
      %p56 = por %p54, %p55
      %p57 = scmp.ne.s32.totalorder %s46, %s47
      %p58 = scmp.eq.s32.totalorder %s17, 0
      %p59 = por %p57, %p58
      %p60 = scmp.ne.s32.totalorder %s46, %s47
      %p61 = scmp.eq.s32.totalorder %s18, 1
      %p62 = por %p60, %p61
      %p64 = scmp.ne.s32.totalorder %s47, %s63
      %p65 = scmp.eq.s32.totalorder %s18, 0
      %p66 = por %p64, %p65
      %s67 = ssub.s32 %s12, %s19
      %p68 = scmp.eq.s32.totalorder %s67, 0
      %s70 = sadd.s32 %s69, 1
      %s71 = scalar_select %p68, %s69, %s70
      %p74 = pneg %p68
      %p75 = scmp.eq.s32.totalorder %s12, 1
      %p76 = por %p74, %p75
      %p77 = scmp.ne.s32.totalorder %s69, %s72
      %p78 = scmp.eq.s32.totalorder %s12, 0
      %p79 = por %p77, %p78
      %p80 = scmp.ne.s32.totalorder %s69, %s72
      %p81 = scmp.eq.s32.totalorder %s17, 1
      %p82 = por %p80, %p81
      %p83 = scmp.ne.s32.totalorder %s72, %s73
      %p84 = scmp.eq.s32.totalorder %s17, 0
      %p85 = por %p83, %p84
      %p86 = scmp.ne.s32.totalorder %s72, %s73
      %p87 = scmp.eq.s32.totalorder %s18, 1
      %p88 = por %p86, %p87
      %p90 = scmp.ne.s32.totalorder %s73, %s89
      %p91 = scmp.eq.s32.totalorder %s18, 0
      %p92 = por %p90, %p91
      %s93 = ssub.s32 %s12, %s19
      %p94 = scmp.eq.s32.totalorder %s93, 0
      %s96 = sadd.s32 %s95, 1
      %s97 = scalar_select %p94, %s95, %s96
      %p100 = pneg %p94
      %p101 = scmp.eq.s32.totalorder %s12, 1
      %p102 = por %p100, %p101
      %p103 = scmp.ne.s32.totalorder %s95, %s98
      %p104 = scmp.eq.s32.totalorder %s12, 0
      %p105 = por %p103, %p104
      %p106 = scmp.ne.s32.totalorder %s95, %s98
      %p107 = scmp.eq.s32.totalorder %s17, 1
      %p108 = por %p106, %p107
      %p109 = scmp.ne.s32.totalorder %s98, %s99
      %p110 = scmp.eq.s32.totalorder %s17, 0
      %p111 = por %p109, %p110
      %p112 = scmp.ne.s32.totalorder %s98, %s99
      %p113 = scmp.eq.s32.totalorder %s18, 1
      %p114 = por %p112, %p113
      %p116 = scmp.ne.s32.totalorder %s99, %s115
      %p117 = scmp.eq.s32.totalorder %s18, 0
      %p118 = por %p116, %p117
      %p119 = scmp.le.s32.totalorder 1, %s12
      %p120 = scmp.lt.s32.totalorder %s12, 3
      %p121 = pnand %p119, %p120
      %p122 = pneg %p121
      // Predicated region
      $region9: #{simple_nn_forward.1} parent=5 // pred_check
        _
      $region10: #{simple_nn_forward.1} parent=5 // pred_check_branch
        %124 = sbr.rel (%p121) target = $region12
      $region11: #{simple_nn_forward.1} parent=5 // pred_region
        %s125 = ssub.s32 %s12, 1
        // Predicated region
        $region13: #{simple_nn_forward.1} parent=11 // pred_check
          %p126 = pneg %p33
        $region14: #{simple_nn_forward.1} parent=11 // pred_check_branch
          %128 = sbr.rel (%p126) target = $region16
        $region15: #{simple_nn_forward.1} parent=11 // pred_region
          _
        $region16: #{simple_nn_forward.1} parent=11 // pred_fallthru
          _
      $region12: #{simple_nn_forward.1} parent=5 // pred_fallthru
        _
      %p129 = scmp.lt.s32.totalorder %s12, 2
      // Predicated region
      $region17: #{simple_nn_forward.1} parent=5 // pred_check
        %p130 = pneg %p129
      $region18: #{simple_nn_forward.1} parent=5 // pred_check_branch
        %132 = sbr.rel (%p130) target = $region20
      $region19: #{simple_nn_forward.1} parent=5 // pred_region
        // Predicated region
        $region21: #{simple_nn_forward.1} parent=19 // pred_check
          %p133 = pneg %p53
        $region22: #{simple_nn_forward.1} parent=19 // pred_check_branch
          %135 = sbr.rel (%p133) target = $region24
        $region23: #{simple_nn_forward.1} parent=19 // pred_region
          %s136 = sand.u32 %s43, 1
          %s137 = sand.u32 %s43, 1
          %s138 = smul.addr %s137, 1024
          %s139 = scalar_lea.vmem [#allocation2], %s138
          %s140 = smul.u32 2, %s12
          %s141 = smul.addr %s140, 4
          %s142 = scalar_lea.vmem %s1, %s141
          // Predicated region
          $region25: #{simple_nn_forward.1} parent=23 // pred_check
            _
          $region26: #{simple_nn_forward.1} parent=23 // pred_check_branch
            %144 = sbr.rel (0) target = $region28
          $region27: #{simple_nn_forward.1} parent=23 // pred_region
            // Predicated region
            $region29: #{simple_nn_forward.1} parent=27 // pred_check
              _
            $region30: #{simple_nn_forward.1} parent=27 // pred_check_branch
              %146 = sbr.rel (0) target = $region32
            $region31: #{simple_nn_forward.1} parent=27 // pred_region
              // Predicated region
              $region44: #{simple_nn_forward.1} parent=31 // pred_check
                _
              $region45: #{simple_nn_forward.1} parent=31 // pred_check_branch
                %415 = sbr.rel (0) target = $region47
              $region46: #{simple_nn_forward.1} parent=31 // pred_region
                loop: start=0, step=1, limit=1
                $region48: #{simple_nn_forward.1} parent=46 // loop_pre_header
                  _
                $region49: #{simple_nn_forward.1} parent=46 // loop_header
                  %s417 = sphi 0, %s421
                  %p418 = scmp.ge.s32.totalorder %s417, 1
                  %s422 = sphi %s142, %s142
                  %s423 = sphi %s139, %s139
                $region50: #{simple_nn_forward.1} parent=46 // loop_header_branch
                  %420 = sbr.rel (%p418) target = $region54
                $region51: #{simple_nn_forward.1} parent=46 // loop_body
                  %v424 = vld [vmem:[%s422] sm:$0xff]
                  %425 = vst [vmem:[%s423] sm:$0xff] %v424
                  %v426 = vld [vmem:[%s422 + $0x10] sm:$0xff]
                  %427 = vst [vmem:[%s423 + $0x8] sm:$0xff] %v426
                  %v428 = vld [vmem:[%s422 + $0x20] sm:$0xff]
                  %429 = vst [vmem:[%s423 + $0x10] sm:$0xff] %v428
                  %v430 = vld [vmem:[%s422 + $0x30] sm:$0xff]
                  %431 = vst [vmem:[%s423 + $0x18] sm:$0xff] %v430
                  %v432 = vld [vmem:[%s422 + $0x40] sm:$0xff]
                  %433 = vst [vmem:[%s423 + $0x20] sm:$0xff] %v432
                  %v434 = vld [vmem:[%s422 + $0x50] sm:$0xff]
                  %435 = vst [vmem:[%s423 + $0x28] sm:$0xff] %v434
                  %v436 = vld [vmem:[%s422 + $0x60] sm:$0xff]
                  %437 = vst [vmem:[%s423 + $0x30] sm:$0xff] %v436
                  %v438 = vld [vmem:[%s422 + $0x70] sm:$0xff]
                  %439 = vst [vmem:[%s423 + $0x38] sm:$0xff] %v438
                  %v440 = vld [vmem:[%s422 + $0x80] sm:$0xff]
                  %441 = vst [vmem:[%s423 + $0x40] sm:$0xff] %v440
                  %v442 = vld [vmem:[%s422 + $0x90] sm:$0xff]
                  %443 = vst [vmem:[%s423 + $0x48] sm:$0xff] %v442
                  %v444 = vld [vmem:[%s422 + $0xa0] sm:$0xff]
                  %445 = vst [vmem:[%s423 + $0x50] sm:$0xff] %v444
                  %v446 = vld [vmem:[%s422 + $0xb0] sm:$0xff]
                  %447 = vst [vmem:[%s423 + $0x58] sm:$0xff] %v446
                  %v448 = vld [vmem:[%s422 + $0xc0] sm:$0xff]
                  %449 = vst [vmem:[%s423 + $0x60] sm:$0xff] %v448
                  %v450 = vld [vmem:[%s422 + $0xd0] sm:$0xff]
                  %451 = vst [vmem:[%s423 + $0x68] sm:$0xff] %v450
                  %v452 = vld [vmem:[%s422 + $0xe0] sm:$0xff]
                  %453 = vst [vmem:[%s423 + $0x70] sm:$0xff] %v452
                  %v454 = vld [vmem:[%s422 + $0xf0] sm:$0xff]
                  %455 = vst [vmem:[%s423 + $0x78] sm:$0xff] %v454
                  %v456 = vld [vmem:[%s422 + $0x100] sm:$0xff]
                  %457 = vst [vmem:[%s423 + $0x80] sm:$0xff] %v456
                  %v458 = vld [vmem:[%s422 + $0x110] sm:$0xff]
                  %459 = vst [vmem:[%s423 + $0x88] sm:$0xff] %v458
                  %v460 = vld [vmem:[%s422 + $0x120] sm:$0xff]
                  %461 = vst [vmem:[%s423 + $0x90] sm:$0xff] %v460
                  %v462 = vld [vmem:[%s422 + $0x130] sm:$0xff]
                  %463 = vst [vmem:[%s423 + $0x98] sm:$0xff] %v462
                  %v464 = vld [vmem:[%s422 + $0x140] sm:$0xff]
                  %465 = vst [vmem:[%s423 + $0xa0] sm:$0xff] %v464
                  %v466 = vld [vmem:[%s422 + $0x150] sm:$0xff]
                  %467 = vst [vmem:[%s423 + $0xa8] sm:$0xff] %v466
                  %v468 = vld [vmem:[%s422 + $0x160] sm:$0xff]
                  %469 = vst [vmem:[%s423 + $0xb0] sm:$0xff] %v468
                  %v470 = vld [vmem:[%s422 + $0x170] sm:$0xff]
                  %471 = vst [vmem:[%s423 + $0xb8] sm:$0xff] %v470
                  %v472 = vld [vmem:[%s422 + $0x180] sm:$0xff]
                  %473 = vst [vmem:[%s423 + $0xc0] sm:$0xff] %v472
                  %v474 = vld [vmem:[%s422 + $0x190] sm:$0xff]
                  %475 = vst [vmem:[%s423 + $0xc8] sm:$0xff] %v474
                  %v476 = vld [vmem:[%s422 + $0x1a0] sm:$0xff]
                  %477 = vst [vmem:[%s423 + $0xd0] sm:$0xff] %v476
                  %v478 = vld [vmem:[%s422 + $0x1b0] sm:$0xff]
                  %479 = vst [vmem:[%s423 + $0xd8] sm:$0xff] %v478
                  %v480 = vld [vmem:[%s422 + $0x1c0] sm:$0xff]
                  %481 = vst [vmem:[%s423 + $0xe0] sm:$0xff] %v480
                  %v482 = vld [vmem:[%s422 + $0x1d0] sm:$0xff]
                  %483 = vst [vmem:[%s423 + $0xe8] sm:$0xff] %v482
                  %v484 = vld [vmem:[%s422 + $0x1e0] sm:$0xff]
                  %485 = vst [vmem:[%s423 + $0xf0] sm:$0xff] %v484
                  %v486 = vld [vmem:[%s422 + $0x1f0] sm:$0xff]
                  %487 = vst [vmem:[%s423 + $0xf8] sm:$0xff] %v486
                  %v488 = vld [vmem:[%s422 + $0x200] sm:$0xff]
                  %489 = vst [vmem:[%s423 + $0x100] sm:$0xff] %v488
                  %v490 = vld [vmem:[%s422 + $0x210] sm:$0xff]
                  %491 = vst [vmem:[%s423 + $0x108] sm:$0xff] %v490
                  %v492 = vld [vmem:[%s422 + $0x220] sm:$0xff]
                  %493 = vst [vmem:[%s423 + $0x110] sm:$0xff] %v492
                  %v494 = vld [vmem:[%s422 + $0x230] sm:$0xff]
                  %495 = vst [vmem:[%s423 + $0x118] sm:$0xff] %v494
                  %v496 = vld [vmem:[%s422 + $0x240] sm:$0xff]
                  %497 = vst [vmem:[%s423 + $0x120] sm:$0xff] %v496
                  %v498 = vld [vmem:[%s422 + $0x250] sm:$0xff]
                  %499 = vst [vmem:[%s423 + $0x128] sm:$0xff] %v498
                  %v500 = vld [vmem:[%s422 + $0x260] sm:$0xff]
                  %501 = vst [vmem:[%s423 + $0x130] sm:$0xff] %v500
                  %v502 = vld [vmem:[%s422 + $0x270] sm:$0xff]
                  %503 = vst [vmem:[%s423 + $0x138] sm:$0xff] %v502
                  %v504 = vld [vmem:[%s422 + $0x280] sm:$0xff]
                  %505 = vst [vmem:[%s423 + $0x140] sm:$0xff] %v504
                  %v506 = vld [vmem:[%s422 + $0x290] sm:$0xff]
                  %507 = vst [vmem:[%s423 + $0x148] sm:$0xff] %v506
                  %v508 = vld [vmem:[%s422 + $0x2a0] sm:$0xff]
                  %509 = vst [vmem:[%s423 + $0x150] sm:$0xff] %v508
                  %v510 = vld [vmem:[%s422 + $0x2b0] sm:$0xff]
                  %511 = vst [vmem:[%s423 + $0x158] sm:$0xff] %v510
                  %v512 = vld [vmem:[%s422 + $0x2c0] sm:$0xff]
                  %513 = vst [vmem:[%s423 + $0x160] sm:$0xff] %v512
                  %v514 = vld [vmem:[%s422 + $0x2d0] sm:$0xff]
                  %515 = vst [vmem:[%s423 + $0x168] sm:$0xff] %v514
                  %v516 = vld [vmem:[%s422 + $0x2e0] sm:$0xff]
                  %517 = vst [vmem:[%s423 + $0x170] sm:$0xff] %v516
                  %v518 = vld [vmem:[%s422 + $0x2f0] sm:$0xff]
                  %519 = vst [vmem:[%s423 + $0x178] sm:$0xff] %v518
                  %v520 = vld [vmem:[%s422 + $0x300] sm:$0xff]
                  %521 = vst [vmem:[%s423 + $0x180] sm:$0xff] %v520
                  %v522 = vld [vmem:[%s422 + $0x310] sm:$0xff]
                  %523 = vst [vmem:[%s423 + $0x188] sm:$0xff] %v522
                  %v524 = vld [vmem:[%s422 + $0x320] sm:$0xff]
                  %525 = vst [vmem:[%s423 + $0x190] sm:$0xff] %v524
                  %v526 = vld [vmem:[%s422 + $0x330] sm:$0xff]
                  %527 = vst [vmem:[%s423 + $0x198] sm:$0xff] %v526
                  %v528 = vld [vmem:[%s422 + $0x340] sm:$0xff]
                  %529 = vst [vmem:[%s423 + $0x1a0] sm:$0xff] %v528
                  %v530 = vld [vmem:[%s422 + $0x350] sm:$0xff]
                  %531 = vst [vmem:[%s423 + $0x1a8] sm:$0xff] %v530
                  %v532 = vld [vmem:[%s422 + $0x360] sm:$0xff]
                  %533 = vst [vmem:[%s423 + $0x1b0] sm:$0xff] %v532
                  %v534 = vld [vmem:[%s422 + $0x370] sm:$0xff]
                  %535 = vst [vmem:[%s423 + $0x1b8] sm:$0xff] %v534
                  %v536 = vld [vmem:[%s422 + $0x380] sm:$0xff]
                  %537 = vst [vmem:[%s423 + $0x1c0] sm:$0xff] %v536
                  %v538 = vld [vmem:[%s422 + $0x390] sm:$0xff]
                  %539 = vst [vmem:[%s423 + $0x1c8] sm:$0xff] %v538
                  %v540 = vld [vmem:[%s422 + $0x3a0] sm:$0xff]
                  %541 = vst [vmem:[%s423 + $0x1d0] sm:$0xff] %v540
                  %v542 = vld [vmem:[%s422 + $0x3b0] sm:$0xff]
                  %543 = vst [vmem:[%s423 + $0x1d8] sm:$0xff] %v542
                  %v544 = vld [vmem:[%s422 + $0x3c0] sm:$0xff]
                  %545 = vst [vmem:[%s423 + $0x1e0] sm:$0xff] %v544
                  %v546 = vld [vmem:[%s422 + $0x3d0] sm:$0xff]
                  %547 = vst [vmem:[%s423 + $0x1e8] sm:$0xff] %v546
                  %v548 = vld [vmem:[%s422 + $0x3e0] sm:$0xff]
                  %549 = vst [vmem:[%s423 + $0x1f0] sm:$0xff] %v548
                  %v550 = vld [vmem:[%s422 + $0x3f0] sm:$0xff]
                  %551 = vst [vmem:[%s423 + $0x1f8] sm:$0xff] %v550
                  %v552 = vld [vmem:[%s422 + $0x400] sm:$0xff]
                  %553 = vst [vmem:[%s423 + $0x200] sm:$0xff] %v552
                  %v554 = vld [vmem:[%s422 + $0x410] sm:$0xff]
                  %555 = vst [vmem:[%s423 + $0x208] sm:$0xff] %v554
                  %v556 = vld [vmem:[%s422 + $0x420] sm:$0xff]
                  %557 = vst [vmem:[%s423 + $0x210] sm:$0xff] %v556
                  %v558 = vld [vmem:[%s422 + $0x430] sm:$0xff]
                  %559 = vst [vmem:[%s423 + $0x218] sm:$0xff] %v558
                  %v560 = vld [vmem:[%s422 + $0x440] sm:$0xff]
                  %561 = vst [vmem:[%s423 + $0x220] sm:$0xff] %v560
                  %v562 = vld [vmem:[%s422 + $0x450] sm:$0xff]
                  %563 = vst [vmem:[%s423 + $0x228] sm:$0xff] %v562
                  %v564 = vld [vmem:[%s422 + $0x460] sm:$0xff]
                  %565 = vst [vmem:[%s423 + $0x230] sm:$0xff] %v564
                  %v566 = vld [vmem:[%s422 + $0x470] sm:$0xff]
                  %567 = vst [vmem:[%s423 + $0x238] sm:$0xff] %v566
                  %v568 = vld [vmem:[%s422 + $0x480] sm:$0xff]
                  %569 = vst [vmem:[%s423 + $0x240] sm:$0xff] %v568
                  %v570 = vld [vmem:[%s422 + $0x490] sm:$0xff]
                  %571 = vst [vmem:[%s423 + $0x248] sm:$0xff] %v570
                  %v572 = vld [vmem:[%s422 + $0x4a0] sm:$0xff]
                  %573 = vst [vmem:[%s423 + $0x250] sm:$0xff] %v572
                  %v574 = vld [vmem:[%s422 + $0x4b0] sm:$0xff]
                  %575 = vst [vmem:[%s423 + $0x258] sm:$0xff] %v574
                  %v576 = vld [vmem:[%s422 + $0x4c0] sm:$0xff]
                  %577 = vst [vmem:[%s423 + $0x260] sm:$0xff] %v576
                  %v578 = vld [vmem:[%s422 + $0x4d0] sm:$0xff]
                  %579 = vst [vmem:[%s423 + $0x268] sm:$0xff] %v578
                  %v580 = vld [vmem:[%s422 + $0x4e0] sm:$0xff]
                  %581 = vst [vmem:[%s423 + $0x270] sm:$0xff] %v580
                  %v582 = vld [vmem:[%s422 + $0x4f0] sm:$0xff]
                  %583 = vst [vmem:[%s423 + $0x278] sm:$0xff] %v582
                  %v584 = vld [vmem:[%s422 + $0x500] sm:$0xff]
                  %585 = vst [vmem:[%s423 + $0x280] sm:$0xff] %v584
                  %v586 = vld [vmem:[%s422 + $0x510] sm:$0xff]
                  %587 = vst [vmem:[%s423 + $0x288] sm:$0xff] %v586
                  %v588 = vld [vmem:[%s422 + $0x520] sm:$0xff]
                  %589 = vst [vmem:[%s423 + $0x290] sm:$0xff] %v588
                  %v590 = vld [vmem:[%s422 + $0x530] sm:$0xff]
                  %591 = vst [vmem:[%s423 + $0x298] sm:$0xff] %v590
                  %v592 = vld [vmem:[%s422 + $0x540] sm:$0xff]
                  %593 = vst [vmem:[%s423 + $0x2a0] sm:$0xff] %v592
                  %v594 = vld [vmem:[%s422 + $0x550] sm:$0xff]
                  %595 = vst [vmem:[%s423 + $0x2a8] sm:$0xff] %v594
                  %v596 = vld [vmem:[%s422 + $0x560] sm:$0xff]
                  %597 = vst [vmem:[%s423 + $0x2b0] sm:$0xff] %v596
                  %v598 = vld [vmem:[%s422 + $0x570] sm:$0xff]
                  %599 = vst [vmem:[%s423 + $0x2b8] sm:$0xff] %v598
                  %v600 = vld [vmem:[%s422 + $0x580] sm:$0xff]
                  %601 = vst [vmem:[%s423 + $0x2c0] sm:$0xff] %v600
                  %v602 = vld [vmem:[%s422 + $0x590] sm:$0xff]
                  %603 = vst [vmem:[%s423 + $0x2c8] sm:$0xff] %v602
                  %v604 = vld [vmem:[%s422 + $0x5a0] sm:$0xff]
                  %605 = vst [vmem:[%s423 + $0x2d0] sm:$0xff] %v604
                  %v606 = vld [vmem:[%s422 + $0x5b0] sm:$0xff]
                  %607 = vst [vmem:[%s423 + $0x2d8] sm:$0xff] %v606
                  %v608 = vld [vmem:[%s422 + $0x5c0] sm:$0xff]
                  %609 = vst [vmem:[%s423 + $0x2e0] sm:$0xff] %v608
                  %v610 = vld [vmem:[%s422 + $0x5d0] sm:$0xff]
                  %611 = vst [vmem:[%s423 + $0x2e8] sm:$0xff] %v610
                  %v612 = vld [vmem:[%s422 + $0x5e0] sm:$0xff]
                  %613 = vst [vmem:[%s423 + $0x2f0] sm:$0xff] %v612
                  %v614 = vld [vmem:[%s422 + $0x5f0] sm:$0xff]
                  %615 = vst [vmem:[%s423 + $0x2f8] sm:$0xff] %v614
                  %v616 = vld [vmem:[%s422 + $0x600] sm:$0xff]
                  %617 = vst [vmem:[%s423 + $0x300] sm:$0xff] %v616
                  %v618 = vld [vmem:[%s422 + $0x610] sm:$0xff]
                  %619 = vst [vmem:[%s423 + $0x308] sm:$0xff] %v618
                  %v620 = vld [vmem:[%s422 + $0x620] sm:$0xff]
                  %621 = vst [vmem:[%s423 + $0x310] sm:$0xff] %v620
                  %v622 = vld [vmem:[%s422 + $0x630] sm:$0xff]
                  %623 = vst [vmem:[%s423 + $0x318] sm:$0xff] %v622
                  %v624 = vld [vmem:[%s422 + $0x640] sm:$0xff]
                  %625 = vst [vmem:[%s423 + $0x320] sm:$0xff] %v624
                  %v626 = vld [vmem:[%s422 + $0x650] sm:$0xff]
                  %627 = vst [vmem:[%s423 + $0x328] sm:$0xff] %v626
                  %v628 = vld [vmem:[%s422 + $0x660] sm:$0xff]
                  %629 = vst [vmem:[%s423 + $0x330] sm:$0xff] %v628
                  %v630 = vld [vmem:[%s422 + $0x670] sm:$0xff]
                  %631 = vst [vmem:[%s423 + $0x338] sm:$0xff] %v630
                  %v632 = vld [vmem:[%s422 + $0x680] sm:$0xff]
                  %633 = vst [vmem:[%s423 + $0x340] sm:$0xff] %v632
                  %v634 = vld [vmem:[%s422 + $0x690] sm:$0xff]
                  %635 = vst [vmem:[%s423 + $0x348] sm:$0xff] %v634
                  %v636 = vld [vmem:[%s422 + $0x6a0] sm:$0xff]
                  %637 = vst [vmem:[%s423 + $0x350] sm:$0xff] %v636
                  %v638 = vld [vmem:[%s422 + $0x6b0] sm:$0xff]
                  %639 = vst [vmem:[%s423 + $0x358] sm:$0xff] %v638
                  %v640 = vld [vmem:[%s422 + $0x6c0] sm:$0xff]
                  %641 = vst [vmem:[%s423 + $0x360] sm:$0xff] %v640
                  %v642 = vld [vmem:[%s422 + $0x6d0] sm:$0xff]
                  %643 = vst [vmem:[%s423 + $0x368] sm:$0xff] %v642
                  %v644 = vld [vmem:[%s422 + $0x6e0] sm:$0xff]
                  %645 = vst [vmem:[%s423 + $0x370] sm:$0xff] %v644
                  %v646 = vld [vmem:[%s422 + $0x6f0] sm:$0xff]
                  %647 = vst [vmem:[%s423 + $0x378] sm:$0xff] %v646
                  %v648 = vld [vmem:[%s422 + $0x700] sm:$0xff]
                  %649 = vst [vmem:[%s423 + $0x380] sm:$0xff] %v648
                  %v650 = vld [vmem:[%s422 + $0x710] sm:$0xff]
                  %651 = vst [vmem:[%s423 + $0x388] sm:$0xff] %v650
                  %v652 = vld [vmem:[%s422 + $0x720] sm:$0xff]
                  %653 = vst [vmem:[%s423 + $0x390] sm:$0xff] %v652
                  %v654 = vld [vmem:[%s422 + $0x730] sm:$0xff]
                  %655 = vst [vmem:[%s423 + $0x398] sm:$0xff] %v654
                  %v656 = vld [vmem:[%s422 + $0x740] sm:$0xff]
                  %657 = vst [vmem:[%s423 + $0x3a0] sm:$0xff] %v656
                  %v658 = vld [vmem:[%s422 + $0x750] sm:$0xff]
                  %659 = vst [vmem:[%s423 + $0x3a8] sm:$0xff] %v658
                  %v660 = vld [vmem:[%s422 + $0x760] sm:$0xff]
                  %661 = vst [vmem:[%s423 + $0x3b0] sm:$0xff] %v660
                  %v662 = vld [vmem:[%s422 + $0x770] sm:$0xff]
                  %663 = vst [vmem:[%s423 + $0x3b8] sm:$0xff] %v662
                  %v664 = vld [vmem:[%s422 + $0x780] sm:$0xff]
                  %665 = vst [vmem:[%s423 + $0x3c0] sm:$0xff] %v664
                  %v666 = vld [vmem:[%s422 + $0x790] sm:$0xff]
                  %667 = vst [vmem:[%s423 + $0x3c8] sm:$0xff] %v666
                  %v668 = vld [vmem:[%s422 + $0x7a0] sm:$0xff]
                  %669 = vst [vmem:[%s423 + $0x3d0] sm:$0xff] %v668
                  %v670 = vld [vmem:[%s422 + $0x7b0] sm:$0xff]
                  %671 = vst [vmem:[%s423 + $0x3d8] sm:$0xff] %v670
                  %v672 = vld [vmem:[%s422 + $0x7c0] sm:$0xff]
                  %673 = vst [vmem:[%s423 + $0x3e0] sm:$0xff] %v672
                  %v674 = vld [vmem:[%s422 + $0x7d0] sm:$0xff]
                  %675 = vst [vmem:[%s423 + $0x3e8] sm:$0xff] %v674
                  %v676 = vld [vmem:[%s422 + $0x7e0] sm:$0xff]
                  %677 = vst [vmem:[%s423 + $0x3f0] sm:$0xff] %v676
                  %v678 = vld [vmem:[%s422 + $0x7f0] sm:$0xff]
                  %679 = vst [vmem:[%s423 + $0x3f8] sm:$0xff] %v678
                $region52: #{simple_nn_forward.1} parent=46 // loop_footer
                  %s421 = sadd.s32 1, %s417
                $region53: #{simple_nn_forward.1} parent=46 // loop_footer_branch
                  %416 = sbr.rel target = $region49
                $region54: #{simple_nn_forward.1} parent=46 // loop_exit
                  _
              $region47: #{simple_nn_forward.1} parent=31 // pred_fallthru
                _
              // Predicated region
              $region55: #{simple_nn_forward.1} parent=31 // pred_check
                _
              $region56: #{simple_nn_forward.1} parent=31 // pred_check_branch
                %681 = sbr.rel target = $region58
              $region57: #{simple_nn_forward.1} parent=31 // pred_region
                _
              $region58: #{simple_nn_forward.1} parent=31 // pred_fallthru
                _
            $region32: #{simple_nn_forward.1} parent=27 // pred_fallthru
              _
            // Predicated region
            $region33: #{simple_nn_forward.1} parent=27 // pred_check
              _
            $region34: #{simple_nn_forward.1} parent=27 // pred_check_branch
              %148 = sbr.rel target = $region36
            $region35: #{simple_nn_forward.1} parent=27 // pred_region
              loop: start=0, step=1, limit=1
              $region37: #{simple_nn_forward.1} parent=35 // loop_pre_header
                _
              $region38: #{simple_nn_forward.1} parent=35 // loop_header
                %s151 = sphi 0, %s155
                %p152 = scmp.ge.s32.totalorder %s151, 1
                %s156 = sphi %s142, %s142
                %s157 = sphi %s139, %s139
              $region39: #{simple_nn_forward.1} parent=35 // loop_header_branch
                %154 = sbr.rel (%p152) target = $region43
              $region40: #{simple_nn_forward.1} parent=35 // loop_body
                %v158 = vld [vmem:[%s156] sm:$0xff]
                %159 = vst [vmem:[%s157] sm:$0xff] %v158
                %v160 = vld [vmem:[%s156 + $0x10] sm:$0xff]
                %161 = vst [vmem:[%s157 + $0x8] sm:$0xff] %v160
                %v162 = vld [vmem:[%s156 + $0x20] sm:$0xff]
                %163 = vst [vmem:[%s157 + $0x10] sm:$0xff] %v162
                %v164 = vld [vmem:[%s156 + $0x30] sm:$0xff]
                %165 = vst [vmem:[%s157 + $0x18] sm:$0xff] %v164
                %v166 = vld [vmem:[%s156 + $0x40] sm:$0xff]
                %167 = vst [vmem:[%s157 + $0x20] sm:$0xff] %v166
                %v168 = vld [vmem:[%s156 + $0x50] sm:$0xff]
                %169 = vst [vmem:[%s157 + $0x28] sm:$0xff] %v168
                %v170 = vld [vmem:[%s156 + $0x60] sm:$0xff]
                %171 = vst [vmem:[%s157 + $0x30] sm:$0xff] %v170
                %v172 = vld [vmem:[%s156 + $0x70] sm:$0xff]
                %173 = vst [vmem:[%s157 + $0x38] sm:$0xff] %v172
                %v174 = vld [vmem:[%s156 + $0x80] sm:$0xff]
                %175 = vst [vmem:[%s157 + $0x40] sm:$0xff] %v174
                %v176 = vld [vmem:[%s156 + $0x90] sm:$0xff]
                %177 = vst [vmem:[%s157 + $0x48] sm:$0xff] %v176
                %v178 = vld [vmem:[%s156 + $0xa0] sm:$0xff]
                %179 = vst [vmem:[%s157 + $0x50] sm:$0xff] %v178
                %v180 = vld [vmem:[%s156 + $0xb0] sm:$0xff]
                %181 = vst [vmem:[%s157 + $0x58] sm:$0xff] %v180
                %v182 = vld [vmem:[%s156 + $0xc0] sm:$0xff]
                %183 = vst [vmem:[%s157 + $0x60] sm:$0xff] %v182
                %v184 = vld [vmem:[%s156 + $0xd0] sm:$0xff]
                %185 = vst [vmem:[%s157 + $0x68] sm:$0xff] %v184
                %v186 = vld [vmem:[%s156 + $0xe0] sm:$0xff]
                %187 = vst [vmem:[%s157 + $0x70] sm:$0xff] %v186
                %v188 = vld [vmem:[%s156 + $0xf0] sm:$0xff]
                %189 = vst [vmem:[%s157 + $0x78] sm:$0xff] %v188
                %v190 = vld [vmem:[%s156 + $0x100] sm:$0xff]
                %191 = vst [vmem:[%s157 + $0x80] sm:$0xff] %v190
                %v192 = vld [vmem:[%s156 + $0x110] sm:$0xff]
                %193 = vst [vmem:[%s157 + $0x88] sm:$0xff] %v192
                %v194 = vld [vmem:[%s156 + $0x120] sm:$0xff]
                %195 = vst [vmem:[%s157 + $0x90] sm:$0xff] %v194
                %v196 = vld [vmem:[%s156 + $0x130] sm:$0xff]
                %197 = vst [vmem:[%s157 + $0x98] sm:$0xff] %v196
                %v198 = vld [vmem:[%s156 + $0x140] sm:$0xff]
                %199 = vst [vmem:[%s157 + $0xa0] sm:$0xff] %v198
                %v200 = vld [vmem:[%s156 + $0x150] sm:$0xff]
                %201 = vst [vmem:[%s157 + $0xa8] sm:$0xff] %v200
                %v202 = vld [vmem:[%s156 + $0x160] sm:$0xff]
                %203 = vst [vmem:[%s157 + $0xb0] sm:$0xff] %v202
                %v204 = vld [vmem:[%s156 + $0x170] sm:$0xff]
                %205 = vst [vmem:[%s157 + $0xb8] sm:$0xff] %v204
                %v206 = vld [vmem:[%s156 + $0x180] sm:$0xff]
                %207 = vst [vmem:[%s157 + $0xc0] sm:$0xff] %v206
                %v208 = vld [vmem:[%s156 + $0x190] sm:$0xff]
                %209 = vst [vmem:[%s157 + $0xc8] sm:$0xff] %v208
                %v210 = vld [vmem:[%s156 + $0x1a0] sm:$0xff]
                %211 = vst [vmem:[%s157 + $0xd0] sm:$0xff] %v210
                %v212 = vld [vmem:[%s156 + $0x1b0] sm:$0xff]
                %213 = vst [vmem:[%s157 + $0xd8] sm:$0xff] %v212
                %v214 = vld [vmem:[%s156 + $0x1c0] sm:$0xff]
                %215 = vst [vmem:[%s157 + $0xe0] sm:$0xff] %v214
                %v216 = vld [vmem:[%s156 + $0x1d0] sm:$0xff]
                %217 = vst [vmem:[%s157 + $0xe8] sm:$0xff] %v216
                %v218 = vld [vmem:[%s156 + $0x1e0] sm:$0xff]
                %219 = vst [vmem:[%s157 + $0xf0] sm:$0xff] %v218
                %v220 = vld [vmem:[%s156 + $0x1f0] sm:$0xff]
                %221 = vst [vmem:[%s157 + $0xf8] sm:$0xff] %v220
                %v222 = vld [vmem:[%s156 + $0x200] sm:$0xff]
                %223 = vst [vmem:[%s157 + $0x100] sm:$0xff] %v222
                %v224 = vld [vmem:[%s156 + $0x210] sm:$0xff]
                %225 = vst [vmem:[%s157 + $0x108] sm:$0xff] %v224
                %v226 = vld [vmem:[%s156 + $0x220] sm:$0xff]
                %227 = vst [vmem:[%s157 + $0x110] sm:$0xff] %v226
                %v228 = vld [vmem:[%s156 + $0x230] sm:$0xff]
                %229 = vst [vmem:[%s157 + $0x118] sm:$0xff] %v228
                %v230 = vld [vmem:[%s156 + $0x240] sm:$0xff]
                %231 = vst [vmem:[%s157 + $0x120] sm:$0xff] %v230
                %v232 = vld [vmem:[%s156 + $0x250] sm:$0xff]
                %233 = vst [vmem:[%s157 + $0x128] sm:$0xff] %v232
                %v234 = vld [vmem:[%s156 + $0x260] sm:$0xff]
                %235 = vst [vmem:[%s157 + $0x130] sm:$0xff] %v234
                %v236 = vld [vmem:[%s156 + $0x270] sm:$0xff]
                %237 = vst [vmem:[%s157 + $0x138] sm:$0xff] %v236
                %v238 = vld [vmem:[%s156 + $0x280] sm:$0xff]
                %239 = vst [vmem:[%s157 + $0x140] sm:$0xff] %v238
                %v240 = vld [vmem:[%s156 + $0x290] sm:$0xff]
                %241 = vst [vmem:[%s157 + $0x148] sm:$0xff] %v240
                %v242 = vld [vmem:[%s156 + $0x2a0] sm:$0xff]
                %243 = vst [vmem:[%s157 + $0x150] sm:$0xff] %v242
                %v244 = vld [vmem:[%s156 + $0x2b0] sm:$0xff]
                %245 = vst [vmem:[%s157 + $0x158] sm:$0xff] %v244
                %v246 = vld [vmem:[%s156 + $0x2c0] sm:$0xff]
                %247 = vst [vmem:[%s157 + $0x160] sm:$0xff] %v246
                %v248 = vld [vmem:[%s156 + $0x2d0] sm:$0xff]
                %249 = vst [vmem:[%s157 + $0x168] sm:$0xff] %v248
                %v250 = vld [vmem:[%s156 + $0x2e0] sm:$0xff]
                %251 = vst [vmem:[%s157 + $0x170] sm:$0xff] %v250
                %v252 = vld [vmem:[%s156 + $0x2f0] sm:$0xff]
                %253 = vst [vmem:[%s157 + $0x178] sm:$0xff] %v252
                %v254 = vld [vmem:[%s156 + $0x300] sm:$0xff]
                %255 = vst [vmem:[%s157 + $0x180] sm:$0xff] %v254
                %v256 = vld [vmem:[%s156 + $0x310] sm:$0xff]
                %257 = vst [vmem:[%s157 + $0x188] sm:$0xff] %v256
                %v258 = vld [vmem:[%s156 + $0x320] sm:$0xff]
                %259 = vst [vmem:[%s157 + $0x190] sm:$0xff] %v258
                %v260 = vld [vmem:[%s156 + $0x330] sm:$0xff]
                %261 = vst [vmem:[%s157 + $0x198] sm:$0xff] %v260
                %v262 = vld [vmem:[%s156 + $0x340] sm:$0xff]
                %263 = vst [vmem:[%s157 + $0x1a0] sm:$0xff] %v262
                %v264 = vld [vmem:[%s156 + $0x350] sm:$0xff]
                %265 = vst [vmem:[%s157 + $0x1a8] sm:$0xff] %v264
                %v266 = vld [vmem:[%s156 + $0x360] sm:$0xff]
                %267 = vst [vmem:[%s157 + $0x1b0] sm:$0xff] %v266
                %v268 = vld [vmem:[%s156 + $0x370] sm:$0xff]
                %269 = vst [vmem:[%s157 + $0x1b8] sm:$0xff] %v268
                %v270 = vld [vmem:[%s156 + $0x380] sm:$0xff]
                %271 = vst [vmem:[%s157 + $0x1c0] sm:$0xff] %v270
                %v272 = vld [vmem:[%s156 + $0x390] sm:$0xff]
                %273 = vst [vmem:[%s157 + $0x1c8] sm:$0xff] %v272
                %v274 = vld [vmem:[%s156 + $0x3a0] sm:$0xff]
                %275 = vst [vmem:[%s157 + $0x1d0] sm:$0xff] %v274
                %v276 = vld [vmem:[%s156 + $0x3b0] sm:$0xff]
                %277 = vst [vmem:[%s157 + $0x1d8] sm:$0xff] %v276
                %v278 = vld [vmem:[%s156 + $0x3c0] sm:$0xff]
                %279 = vst [vmem:[%s157 + $0x1e0] sm:$0xff] %v278
                %v280 = vld [vmem:[%s156 + $0x3d0] sm:$0xff]
                %281 = vst [vmem:[%s157 + $0x1e8] sm:$0xff] %v280
                %v282 = vld [vmem:[%s156 + $0x3e0] sm:$0xff]
                %283 = vst [vmem:[%s157 + $0x1f0] sm:$0xff] %v282
                %v284 = vld [vmem:[%s156 + $0x3f0] sm:$0xff]
                %285 = vst [vmem:[%s157 + $0x1f8] sm:$0xff] %v284
                %v286 = vld [vmem:[%s156 + $0x400] sm:$0xff]
                %287 = vst [vmem:[%s157 + $0x200] sm:$0xff] %v286
                %v288 = vld [vmem:[%s156 + $0x410] sm:$0xff]
                %289 = vst [vmem:[%s157 + $0x208] sm:$0xff] %v288
                %v290 = vld [vmem:[%s156 + $0x420] sm:$0xff]
                %291 = vst [vmem:[%s157 + $0x210] sm:$0xff] %v290
                %v292 = vld [vmem:[%s156 + $0x430] sm:$0xff]
                %293 = vst [vmem:[%s157 + $0x218] sm:$0xff] %v292
                %v294 = vld [vmem:[%s156 + $0x440] sm:$0xff]
                %295 = vst [vmem:[%s157 + $0x220] sm:$0xff] %v294
                %v296 = vld [vmem:[%s156 + $0x450] sm:$0xff]
                %297 = vst [vmem:[%s157 + $0x228] sm:$0xff] %v296
                %v298 = vld [vmem:[%s156 + $0x460] sm:$0xff]
                %299 = vst [vmem:[%s157 + $0x230] sm:$0xff] %v298
                %v300 = vld [vmem:[%s156 + $0x470] sm:$0xff]
                %301 = vst [vmem:[%s157 + $0x238] sm:$0xff] %v300
                %v302 = vld [vmem:[%s156 + $0x480] sm:$0xff]
                %303 = vst [vmem:[%s157 + $0x240] sm:$0xff] %v302
                %v304 = vld [vmem:[%s156 + $0x490] sm:$0xff]
                %305 = vst [vmem:[%s157 + $0x248] sm:$0xff] %v304
                %v306 = vld [vmem:[%s156 + $0x4a0] sm:$0xff]
                %307 = vst [vmem:[%s157 + $0x250] sm:$0xff] %v306
                %v308 = vld [vmem:[%s156 + $0x4b0] sm:$0xff]
                %309 = vst [vmem:[%s157 + $0x258] sm:$0xff] %v308
                %v310 = vld [vmem:[%s156 + $0x4c0] sm:$0xff]
                %311 = vst [vmem:[%s157 + $0x260] sm:$0xff] %v310
                %v312 = vld [vmem:[%s156 + $0x4d0] sm:$0xff]
                %313 = vst [vmem:[%s157 + $0x268] sm:$0xff] %v312
                %v314 = vld [vmem:[%s156 + $0x4e0] sm:$0xff]
                %315 = vst [vmem:[%s157 + $0x270] sm:$0xff] %v314
                %v316 = vld [vmem:[%s156 + $0x4f0] sm:$0xff]
                %317 = vst [vmem:[%s157 + $0x278] sm:$0xff] %v316
                %v318 = vld [vmem:[%s156 + $0x500] sm:$0xff]
                %319 = vst [vmem:[%s157 + $0x280] sm:$0xff] %v318
                %v320 = vld [vmem:[%s156 + $0x510] sm:$0xff]
                %321 = vst [vmem:[%s157 + $0x288] sm:$0xff] %v320
                %v322 = vld [vmem:[%s156 + $0x520] sm:$0xff]
                %323 = vst [vmem:[%s157 + $0x290] sm:$0xff] %v322
                %v324 = vld [vmem:[%s156 + $0x530] sm:$0xff]
                %325 = vst [vmem:[%s157 + $0x298] sm:$0xff] %v324
                %v326 = vld [vmem:[%s156 + $0x540] sm:$0xff]
                %327 = vst [vmem:[%s157 + $0x2a0] sm:$0xff] %v326
                %v328 = vld [vmem:[%s156 + $0x550] sm:$0xff]
                %329 = vst [vmem:[%s157 + $0x2a8] sm:$0xff] %v328
                %v330 = vld [vmem:[%s156 + $0x560] sm:$0xff]
                %331 = vst [vmem:[%s157 + $0x2b0] sm:$0xff] %v330
                %v332 = vld [vmem:[%s156 + $0x570] sm:$0xff]
                %333 = vst [vmem:[%s157 + $0x2b8] sm:$0xff] %v332
                %v334 = vld [vmem:[%s156 + $0x580] sm:$0xff]
                %335 = vst [vmem:[%s157 + $0x2c0] sm:$0xff] %v334
                %v336 = vld [vmem:[%s156 + $0x590] sm:$0xff]
                %337 = vst [vmem:[%s157 + $0x2c8] sm:$0xff] %v336
                %v338 = vld [vmem:[%s156 + $0x5a0] sm:$0xff]
                %339 = vst [vmem:[%s157 + $0x2d0] sm:$0xff] %v338
                %v340 = vld [vmem:[%s156 + $0x5b0] sm:$0xff]
                %341 = vst [vmem:[%s157 + $0x2d8] sm:$0xff] %v340
                %v342 = vld [vmem:[%s156 + $0x5c0] sm:$0xff]
                %343 = vst [vmem:[%s157 + $0x2e0] sm:$0xff] %v342
                %v344 = vld [vmem:[%s156 + $0x5d0] sm:$0xff]
                %345 = vst [vmem:[%s157 + $0x2e8] sm:$0xff] %v344
                %v346 = vld [vmem:[%s156 + $0x5e0] sm:$0xff]
                %347 = vst [vmem:[%s157 + $0x2f0] sm:$0xff] %v346
                %v348 = vld [vmem:[%s156 + $0x5f0] sm:$0xff]
                %349 = vst [vmem:[%s157 + $0x2f8] sm:$0xff] %v348
                %v350 = vld [vmem:[%s156 + $0x600] sm:$0xff]
                %351 = vst [vmem:[%s157 + $0x300] sm:$0xff] %v350
                %v352 = vld [vmem:[%s156 + $0x610] sm:$0xff]
                %353 = vst [vmem:[%s157 + $0x308] sm:$0xff] %v352
                %v354 = vld [vmem:[%s156 + $0x620] sm:$0xff]
                %355 = vst [vmem:[%s157 + $0x310] sm:$0xff] %v354
                %v356 = vld [vmem:[%s156 + $0x630] sm:$0xff]
                %357 = vst [vmem:[%s157 + $0x318] sm:$0xff] %v356
                %v358 = vld [vmem:[%s156 + $0x640] sm:$0xff]
                %359 = vst [vmem:[%s157 + $0x320] sm:$0xff] %v358
                %v360 = vld [vmem:[%s156 + $0x650] sm:$0xff]
                %361 = vst [vmem:[%s157 + $0x328] sm:$0xff] %v360
                %v362 = vld [vmem:[%s156 + $0x660] sm:$0xff]
                %363 = vst [vmem:[%s157 + $0x330] sm:$0xff] %v362
                %v364 = vld [vmem:[%s156 + $0x670] sm:$0xff]
                %365 = vst [vmem:[%s157 + $0x338] sm:$0xff] %v364
                %v366 = vld [vmem:[%s156 + $0x680] sm:$0xff]
                %367 = vst [vmem:[%s157 + $0x340] sm:$0xff] %v366
                %v368 = vld [vmem:[%s156 + $0x690] sm:$0xff]
                %369 = vst [vmem:[%s157 + $0x348] sm:$0xff] %v368
                %v370 = vld [vmem:[%s156 + $0x6a0] sm:$0xff]
                %371 = vst [vmem:[%s157 + $0x350] sm:$0xff] %v370
                %v372 = vld [vmem:[%s156 + $0x6b0] sm:$0xff]
                %373 = vst [vmem:[%s157 + $0x358] sm:$0xff] %v372
                %v374 = vld [vmem:[%s156 + $0x6c0] sm:$0xff]
                %375 = vst [vmem:[%s157 + $0x360] sm:$0xff] %v374
                %v376 = vld [vmem:[%s156 + $0x6d0] sm:$0xff]
                %377 = vst [vmem:[%s157 + $0x368] sm:$0xff] %v376
                %v378 = vld [vmem:[%s156 + $0x6e0] sm:$0xff]
                %379 = vst [vmem:[%s157 + $0x370] sm:$0xff] %v378
                %v380 = vld [vmem:[%s156 + $0x6f0] sm:$0xff]
                %381 = vst [vmem:[%s157 + $0x378] sm:$0xff] %v380
                %v382 = vld [vmem:[%s156 + $0x700] sm:$0xff]
                %383 = vst [vmem:[%s157 + $0x380] sm:$0xff] %v382
                %v384 = vld [vmem:[%s156 + $0x710] sm:$0xff]
                %385 = vst [vmem:[%s157 + $0x388] sm:$0xff] %v384
                %v386 = vld [vmem:[%s156 + $0x720] sm:$0xff]
                %387 = vst [vmem:[%s157 + $0x390] sm:$0xff] %v386
                %v388 = vld [vmem:[%s156 + $0x730] sm:$0xff]
                %389 = vst [vmem:[%s157 + $0x398] sm:$0xff] %v388
                %v390 = vld [vmem:[%s156 + $0x740] sm:$0xff]
                %391 = vst [vmem:[%s157 + $0x3a0] sm:$0xff] %v390
                %v392 = vld [vmem:[%s156 + $0x750] sm:$0xff]
                %393 = vst [vmem:[%s157 + $0x3a8] sm:$0xff] %v392
                %v394 = vld [vmem:[%s156 + $0x760] sm:$0xff]
                %395 = vst [vmem:[%s157 + $0x3b0] sm:$0xff] %v394
                %v396 = vld [vmem:[%s156 + $0x770] sm:$0xff]
                %397 = vst [vmem:[%s157 + $0x3b8] sm:$0xff] %v396
                %v398 = vld [vmem:[%s156 + $0x780] sm:$0xff]
                %399 = vst [vmem:[%s157 + $0x3c0] sm:$0xff] %v398
                %v400 = vld [vmem:[%s156 + $0x790] sm:$0xff]
                %401 = vst [vmem:[%s157 + $0x3c8] sm:$0xff] %v400
                %v402 = vld [vmem:[%s156 + $0x7a0] sm:$0xff]
                %403 = vst [vmem:[%s157 + $0x3d0] sm:$0xff] %v402
                %v404 = vld [vmem:[%s156 + $0x7b0] sm:$0xff]
                %405 = vst [vmem:[%s157 + $0x3d8] sm:$0xff] %v404
                %v406 = vld [vmem:[%s156 + $0x7c0] sm:$0xff]
                %407 = vst [vmem:[%s157 + $0x3e0] sm:$0xff] %v406
                %v408 = vld [vmem:[%s156 + $0x7d0] sm:$0xff]
                %409 = vst [vmem:[%s157 + $0x3e8] sm:$0xff] %v408
                %v410 = vld [vmem:[%s156 + $0x7e0] sm:$0xff]
                %411 = vst [vmem:[%s157 + $0x3f0] sm:$0xff] %v410
                %v412 = vld [vmem:[%s156 + $0x7f0] sm:$0xff]
                %413 = vst [vmem:[%s157 + $0x3f8] sm:$0xff] %v412
              $region41: #{simple_nn_forward.1} parent=35 // loop_footer
                %s155 = sadd.s32 1, %s151
              $region42: #{simple_nn_forward.1} parent=35 // loop_footer_branch
                %150 = sbr.rel target = $region38
              $region43: #{simple_nn_forward.1} parent=35 // loop_exit
                _
            $region36: #{simple_nn_forward.1} parent=27 // pred_fallthru
              _
          $region28: #{simple_nn_forward.1} parent=23 // pred_fallthru
            _
          %682 = vnop
        $region24: #{simple_nn_forward.1} parent=19 // pred_fallthru
          _
        // Predicated region
        $region59: #{simple_nn_forward.1} parent=19 // pred_check
          %p683 = pneg %p79
        $region60: #{simple_nn_forward.1} parent=19 // pred_check_branch
          %685 = sbr.rel (%p683) target = $region62
        $region61: #{simple_nn_forward.1} parent=19 // pred_region
          %s686 = smul.u32 2, %s12
          %p687 = scmp.lt.s32.totalorder %s686, 3
          %s688 = scalar_select %p687, %s686, 3
          %s689 = scalar_lea.vmem %s2, %s688
          %s690 = smul.u32 2, %s12
        $region62: #{simple_nn_forward.1} parent=19 // pred_fallthru
          _
      $region20: #{simple_nn_forward.1} parent=5 // pred_fallthru
        _
      %p691 = scmp.le.s32.totalorder 1, %s12
      %p692 = scmp.lt.s32.totalorder %s12, 3
      %p693 = pnand %p691, %p692
      %p694 = pneg %p693
      // Predicated region
      $region63: #{simple_nn_forward.1} parent=5 // pred_check
        _
      $region64: #{simple_nn_forward.1} parent=5 // pred_check_branch
        %696 = sbr.rel (%p693) target = $region66
      $region65: #{simple_nn_forward.1} parent=5 // pred_region
        %s697 = ssub.s32 %s12, 1
        %s698 = sand.u32 %s46, 1
        %s699 = sand.u32 %s46, 1
        %s700 = smul.addr %s699, 1024
        %s701 = scalar_lea.vmem [#allocation2], %s700
        // Predicated region
        $region67: #{simple_nn_forward.1} parent=65 // pred_check
          %p702 = pneg %p59
        $region68: #{simple_nn_forward.1} parent=65 // pred_check_branch
          %704 = sbr.rel (%p702) target = $region70
        $region69: #{simple_nn_forward.1} parent=65 // pred_region
          _
        $region70: #{simple_nn_forward.1} parent=65 // pred_fallthru
          _
        %p705 = pneg %p33
        %p706 = pneg %p30
        %s707 = sand.u32 %s46, 1
        %s708 = sand.u32 %s46, 1
        %s709 = smul.addr %s708, 1024
        %s710 = scalar_lea.vmem [#allocation2], %s709
        %p711 = pneg %p59
        %p712 = pneg %p56
        %s713 = smul.u32 2, %s17
        %p714 = scmp.lt.s32.totalorder %s713, 3
        %s715 = scalar_select %p714, %s713, 3
        %s716 = scalar_lea.vmem %s2, %s715
        %p717 = pneg %p85
        %p718 = pneg %p82
        %p719 = pneg %p111
        %p720 = pneg %p108
        %s721 = sand.u32 %s98, 1
        %s722 = scalar_lea.sflag [#allocation4], %s721
        %s723 = sand.u32 %s98, 1
        %s724 = smul.addr %s723, 16
        %s725 = scalar_lea.vmem [#allocation3], %s724
        %s726 = smul.u32 2, %s17
        %s727 = smul.u32 2, %s17
        %p728 = scmp.lt.s32.totalorder %s727, 3
        %s729 = scalar_select %p728, %s727, 3
        %s730 = scalar_lea.vmem %s2, %s729
        %s731 = smul.u32 2, %s17
        %s732 = smul.u32 2, %s17
        %v733 = vld [vmem:[%s0] sm:$0xff]
        %v734 = vld [vmem:[%s0 + $0x8] sm:$0xff]
        %v735 = vld [vmem:[%s0 + $0x10] sm:$0xff]
        %v736 = vld [vmem:[%s0 + $0x18] sm:$0xff]
        %v737 = vld [vmem:[%s701] sm:$0xff]
        %v738 = vld [vmem:[%s701 + $0x8] sm:$0xff]
        %v739 = vld [vmem:[%s701 + $0x10] sm:$0xff]
        %v740 = vld [vmem:[%s701 + $0x18] sm:$0xff]
        %v741 = vld [vmem:[%s701 + $0x20] sm:$0xff]
        %v742 = vld [vmem:[%s701 + $0x28] sm:$0xff]
        %v743 = vld [vmem:[%s701 + $0x30] sm:$0xff]
        %v744 = vld [vmem:[%s701 + $0x38] sm:$0xff]
        %v745 = vld [vmem:[%s701 + $0x40] sm:$0xff]
        %v746 = vld [vmem:[%s701 + $0x48] sm:$0xff]
        %v747 = vld [vmem:[%s701 + $0x50] sm:$0xff]
        %v748 = vld [vmem:[%s701 + $0x58] sm:$0xff]
        %v749 = vld [vmem:[%s701 + $0x60] sm:$0xff]
        %v750 = vld [vmem:[%s701 + $0x68] sm:$0xff]
        %v751 = vld [vmem:[%s701 + $0x70] sm:$0xff]
        %v752 = vld [vmem:[%s701 + $0x78] sm:$0xff]
        %v753 = vld [vmem:[%s701 + $0x80] sm:$0xff]
        %v754 = vld [vmem:[%s701 + $0x88] sm:$0xff]
        %v755 = vld [vmem:[%s701 + $0x90] sm:$0xff]
        %v756 = vld [vmem:[%s701 + $0x98] sm:$0xff]
        %v757 = vld [vmem:[%s701 + $0xa0] sm:$0xff]
        %v758 = vld [vmem:[%s701 + $0xa8] sm:$0xff]
        %v759 = vld [vmem:[%s701 + $0xb0] sm:$0xff]
        %v760 = vld [vmem:[%s701 + $0xb8] sm:$0xff]
        %v761 = vld [vmem:[%s701 + $0xc0] sm:$0xff]
        %v762 = vld [vmem:[%s701 + $0xc8] sm:$0xff]
        %v763 = vld [vmem:[%s701 + $0xd0] sm:$0xff]
        %v764 = vld [vmem:[%s701 + $0xd8] sm:$0xff]
        %v765 = vld [vmem:[%s701 + $0xe0] sm:$0xff]
        %v766 = vld [vmem:[%s701 + $0xe8] sm:$0xff]
        %v767 = vld [vmem:[%s701 + $0xf0] sm:$0xff]
        %v768 = vld [vmem:[%s701 + $0xf8] sm:$0xff]
        %v769 = vld [vmem:[%s701 + $0x100] sm:$0xff]
        %v770 = vld [vmem:[%s701 + $0x108] sm:$0xff]
        %v771 = vld [vmem:[%s701 + $0x110] sm:$0xff]
        %v772 = vld [vmem:[%s701 + $0x118] sm:$0xff]
        %v773 = vld [vmem:[%s701 + $0x120] sm:$0xff]
        %v774 = vld [vmem:[%s701 + $0x128] sm:$0xff]
        %v775 = vld [vmem:[%s701 + $0x130] sm:$0xff]
        %v776 = vld [vmem:[%s701 + $0x138] sm:$0xff]
        %v777 = vld [vmem:[%s701 + $0x140] sm:$0xff]
        %v778 = vld [vmem:[%s701 + $0x148] sm:$0xff]
        %v779 = vld [vmem:[%s701 + $0x150] sm:$0xff]
        %v780 = vld [vmem:[%s701 + $0x158] sm:$0xff]
        %v781 = vld [vmem:[%s701 + $0x160] sm:$0xff]
        %v782 = vld [vmem:[%s701 + $0x168] sm:$0xff]
        %v783 = vld [vmem:[%s701 + $0x170] sm:$0xff]
        %v784 = vld [vmem:[%s701 + $0x178] sm:$0xff]
        %v785 = vld [vmem:[%s701 + $0x180] sm:$0xff]
        %v786 = vld [vmem:[%s701 + $0x188] sm:$0xff]
        %v787 = vld [vmem:[%s701 + $0x190] sm:$0xff]
        %v788 = vld [vmem:[%s701 + $0x198] sm:$0xff]
        %v789 = vld [vmem:[%s701 + $0x1a0] sm:$0xff]
        %v790 = vld [vmem:[%s701 + $0x1a8] sm:$0xff]
        %v791 = vld [vmem:[%s701 + $0x1b0] sm:$0xff]
        %v792 = vld [vmem:[%s701 + $0x1b8] sm:$0xff]
        %v793 = vld [vmem:[%s701 + $0x1c0] sm:$0xff]
        %v794 = vld [vmem:[%s701 + $0x1c8] sm:$0xff]
        %v795 = vld [vmem:[%s701 + $0x1d0] sm:$0xff]
        %v796 = vld [vmem:[%s701 + $0x1d8] sm:$0xff]
        %v797 = vld [vmem:[%s701 + $0x1e0] sm:$0xff]
        %v798 = vld [vmem:[%s701 + $0x1e8] sm:$0xff]
        %v799 = vld [vmem:[%s701 + $0x1f0] sm:$0xff]
        %v800 = vld [vmem:[%s701 + $0x1f8] sm:$0xff]
        %v801 = vld [vmem:[%s701 + $0x200] sm:$0xff]
        %v802 = vld [vmem:[%s701 + $0x208] sm:$0xff]
        %v803 = vld [vmem:[%s701 + $0x210] sm:$0xff]
        %v804 = vld [vmem:[%s701 + $0x218] sm:$0xff]
        %v805 = vld [vmem:[%s701 + $0x220] sm:$0xff]
        %v806 = vld [vmem:[%s701 + $0x228] sm:$0xff]
        %v807 = vld [vmem:[%s701 + $0x230] sm:$0xff]
        %v808 = vld [vmem:[%s701 + $0x238] sm:$0xff]
        %v809 = vld [vmem:[%s701 + $0x240] sm:$0xff]
        %v810 = vld [vmem:[%s701 + $0x248] sm:$0xff]
        %v811 = vld [vmem:[%s701 + $0x250] sm:$0xff]
        %v812 = vld [vmem:[%s701 + $0x258] sm:$0xff]
        %v813 = vld [vmem:[%s701 + $0x260] sm:$0xff]
        %v814 = vld [vmem:[%s701 + $0x268] sm:$0xff]
        %v815 = vld [vmem:[%s701 + $0x270] sm:$0xff]
        %v816 = vld [vmem:[%s701 + $0x278] sm:$0xff]
        %v817 = vld [vmem:[%s701 + $0x280] sm:$0xff]
        %v818 = vld [vmem:[%s701 + $0x288] sm:$0xff]
        %v819 = vld [vmem:[%s701 + $0x290] sm:$0xff]
        %v820 = vld [vmem:[%s701 + $0x298] sm:$0xff]
        %v821 = vld [vmem:[%s701 + $0x2a0] sm:$0xff]
        %v822 = vld [vmem:[%s701 + $0x2a8] sm:$0xff]
        %v823 = vld [vmem:[%s701 + $0x2b0] sm:$0xff]
        %v824 = vld [vmem:[%s701 + $0x2b8] sm:$0xff]
        %v825 = vld [vmem:[%s701 + $0x2c0] sm:$0xff]
        %v826 = vld [vmem:[%s701 + $0x2c8] sm:$0xff]
        %v827 = vld [vmem:[%s701 + $0x2d0] sm:$0xff]
        %v828 = vld [vmem:[%s701 + $0x2d8] sm:$0xff]
        %v829 = vld [vmem:[%s701 + $0x2e0] sm:$0xff]
        %v830 = vld [vmem:[%s701 + $0x2e8] sm:$0xff]
        %v831 = vld [vmem:[%s701 + $0x2f0] sm:$0xff]
        %v832 = vld [vmem:[%s701 + $0x2f8] sm:$0xff]
        %v833 = vld [vmem:[%s701 + $0x300] sm:$0xff]
        %v834 = vld [vmem:[%s701 + $0x308] sm:$0xff]
        %v835 = vld [vmem:[%s701 + $0x310] sm:$0xff]
        %v836 = vld [vmem:[%s701 + $0x318] sm:$0xff]
        %v837 = vld [vmem:[%s701 + $0x320] sm:$0xff]
        %v838 = vld [vmem:[%s701 + $0x328] sm:$0xff]
        %v839 = vld [vmem:[%s701 + $0x330] sm:$0xff]
        %v840 = vld [vmem:[%s701 + $0x338] sm:$0xff]
        %v841 = vld [vmem:[%s701 + $0x340] sm:$0xff]
        %v842 = vld [vmem:[%s701 + $0x348] sm:$0xff]
        %v843 = vld [vmem:[%s701 + $0x350] sm:$0xff]
        %v844 = vld [vmem:[%s701 + $0x358] sm:$0xff]
        %v845 = vld [vmem:[%s701 + $0x360] sm:$0xff]
        %v846 = vld [vmem:[%s701 + $0x368] sm:$0xff]
        %v847 = vld [vmem:[%s701 + $0x370] sm:$0xff]
        %v848 = vld [vmem:[%s701 + $0x378] sm:$0xff]
        %v849 = vld [vmem:[%s701 + $0x380] sm:$0xff]
        %v850 = vld [vmem:[%s701 + $0x388] sm:$0xff]
        %v851 = vld [vmem:[%s701 + $0x390] sm:$0xff]
        %v852 = vld [vmem:[%s701 + $0x398] sm:$0xff]
        %v853 = vld [vmem:[%s701 + $0x3a0] sm:$0xff]
        %v854 = vld [vmem:[%s701 + $0x3a8] sm:$0xff]
        %v855 = vld [vmem:[%s701 + $0x3b0] sm:$0xff]
        %v856 = vld [vmem:[%s701 + $0x3b8] sm:$0xff]
        %v857 = vld [vmem:[%s701 + $0x3c0] sm:$0xff]
        %v858 = vld [vmem:[%s701 + $0x3c8] sm:$0xff]
        %v859 = vld [vmem:[%s701 + $0x3d0] sm:$0xff]
        %v860 = vld [vmem:[%s701 + $0x3d8] sm:$0xff]
        %v861 = vld [vmem:[%s701 + $0x3e0] sm:$0xff]
        %v862 = vld [vmem:[%s701 + $0x3e8] sm:$0xff]
        %v863 = vld [vmem:[%s701 + $0x3f0] sm:$0xff]
        %v864 = vld [vmem:[%s701 + $0x3f8] sm:$0xff]
        %v865 = vld [vmem:[%s730] sm:$0x3]
        %v867 = vlaneseq
        %v868 = vshrl.u32 %v867, 7
        %v869 = vsub.s32 0, %v868
        %v870 = vrot.slane %v865, %v869
        %v871 = vlaneseq
        %v872 = vshrl.u32 %v871, 7
        %v873 = vsub.s32 1, %v872
        %v874 = vrot.slane %v865, %v873
        %v881 = vunpack.c.l.b16 %v733
        %v882 = vunpack.c.h.b16 %v733
        %v883 = vunpack.c.l.b16 %v734
        %v884 = vunpack.c.h.b16 %v734
        %v885 = vunpack.c.l.b16 %v735
        %v886 = vunpack.c.h.b16 %v735
        %v887 = vunpack.c.l.b16 %v736
        %v888 = vunpack.c.h.b16 %v736
        %v889 = vpack.c.b16 %v881, %v881
        %v890 = vpack.c.b16 %v882, %v882
        %v891 = vpack.c.b16 %v883, %v883
        %v892 = vpack.c.b16 %v884, %v884
        %v893 = vpack.c.b16 %v885, %v885
        %v894 = vpack.c.b16 %v886, %v886
        %v895 = vpack.c.b16 %v887, %v887
        %v896 = vpack.c.b16 %v888, %v888
        %v1033 = vunpack.c.l.b16 %v737
        %v1034 = vunpack.c.h.b16 %v737
        %v1035 = vunpack.c.l.b16 %v738
        %v1036 = vunpack.c.h.b16 %v738
        %v1037 = vunpack.c.l.b16 %v739
        %v1038 = vunpack.c.h.b16 %v739
        %v1039 = vunpack.c.l.b16 %v740
        %v1040 = vunpack.c.h.b16 %v740
        %v1041 = vunpack.c.l.b16 %v741
        %v1042 = vunpack.c.h.b16 %v741
        %v1043 = vunpack.c.l.b16 %v742
        %v1044 = vunpack.c.h.b16 %v742
        %v1045 = vunpack.c.l.b16 %v743
        %v1046 = vunpack.c.h.b16 %v743
        %v1047 = vunpack.c.l.b16 %v744
        %v1048 = vunpack.c.h.b16 %v744
        %v1049 = vunpack.c.l.b16 %v745
        %v1050 = vunpack.c.h.b16 %v745
        %v1051 = vunpack.c.l.b16 %v746
        %v1052 = vunpack.c.h.b16 %v746
        %v1053 = vunpack.c.l.b16 %v747
        %v1054 = vunpack.c.h.b16 %v747
        %v1055 = vunpack.c.l.b16 %v748
        %v1056 = vunpack.c.h.b16 %v748
        %v1057 = vunpack.c.l.b16 %v749
        %v1058 = vunpack.c.h.b16 %v749
        %v1059 = vunpack.c.l.b16 %v750
        %v1060 = vunpack.c.h.b16 %v750
        %v1061 = vunpack.c.l.b16 %v751
        %v1062 = vunpack.c.h.b16 %v751
        %v1063 = vunpack.c.l.b16 %v752
        %v1064 = vunpack.c.h.b16 %v752
        %v1065 = vunpack.c.l.b16 %v753
        %v1066 = vunpack.c.h.b16 %v753
        %v1067 = vunpack.c.l.b16 %v754
        %v1068 = vunpack.c.h.b16 %v754
        %v1069 = vunpack.c.l.b16 %v755
        %v1070 = vunpack.c.h.b16 %v755
        %v1071 = vunpack.c.l.b16 %v756
        %v1072 = vunpack.c.h.b16 %v756
        %v1073 = vunpack.c.l.b16 %v757
        %v1074 = vunpack.c.h.b16 %v757
        %v1075 = vunpack.c.l.b16 %v758
        %v1076 = vunpack.c.h.b16 %v758
        %v1077 = vunpack.c.l.b16 %v759
        %v1078 = vunpack.c.h.b16 %v759
        %v1079 = vunpack.c.l.b16 %v760
        %v1080 = vunpack.c.h.b16 %v760
        %v1081 = vunpack.c.l.b16 %v761
        %v1082 = vunpack.c.h.b16 %v761
        %v1083 = vunpack.c.l.b16 %v762
        %v1084 = vunpack.c.h.b16 %v762
        %v1085 = vunpack.c.l.b16 %v763
        %v1086 = vunpack.c.h.b16 %v763
        %v1087 = vunpack.c.l.b16 %v764
        %v1088 = vunpack.c.h.b16 %v764
        %v1089 = vunpack.c.l.b16 %v765
        %v1090 = vunpack.c.h.b16 %v765
        %v1091 = vunpack.c.l.b16 %v766
        %v1092 = vunpack.c.h.b16 %v766
        %v1093 = vunpack.c.l.b16 %v767
        %v1094 = vunpack.c.h.b16 %v767
        %v1095 = vunpack.c.l.b16 %v768
        %v1096 = vunpack.c.h.b16 %v768
        %v1097 = vunpack.c.l.b16 %v769
        %v1098 = vunpack.c.h.b16 %v769
        %v1099 = vunpack.c.l.b16 %v770
        %v1100 = vunpack.c.h.b16 %v770
        %v1101 = vunpack.c.l.b16 %v771
        %v1102 = vunpack.c.h.b16 %v771
        %v1103 = vunpack.c.l.b16 %v772
        %v1104 = vunpack.c.h.b16 %v772
        %v1105 = vunpack.c.l.b16 %v773
        %v1106 = vunpack.c.h.b16 %v773
        %v1107 = vunpack.c.l.b16 %v774
        %v1108 = vunpack.c.h.b16 %v774
        %v1109 = vunpack.c.l.b16 %v775
        %v1110 = vunpack.c.h.b16 %v775
        %v1111 = vunpack.c.l.b16 %v776
        %v1112 = vunpack.c.h.b16 %v776
        %v1113 = vunpack.c.l.b16 %v777
        %v1114 = vunpack.c.h.b16 %v777
        %v1115 = vunpack.c.l.b16 %v778
        %v1116 = vunpack.c.h.b16 %v778
        %v1117 = vunpack.c.l.b16 %v779
        %v1118 = vunpack.c.h.b16 %v779
        %v1119 = vunpack.c.l.b16 %v780
        %v1120 = vunpack.c.h.b16 %v780
        %v1121 = vunpack.c.l.b16 %v781
        %v1122 = vunpack.c.h.b16 %v781
        %v1123 = vunpack.c.l.b16 %v782
        %v1124 = vunpack.c.h.b16 %v782
        %v1125 = vunpack.c.l.b16 %v783
        %v1126 = vunpack.c.h.b16 %v783
        %v1127 = vunpack.c.l.b16 %v784
        %v1128 = vunpack.c.h.b16 %v784
        %v1129 = vunpack.c.l.b16 %v785
        %v1130 = vunpack.c.h.b16 %v785
        %v1131 = vunpack.c.l.b16 %v786
        %v1132 = vunpack.c.h.b16 %v786
        %v1133 = vunpack.c.l.b16 %v787
        %v1134 = vunpack.c.h.b16 %v787
        %v1135 = vunpack.c.l.b16 %v788
        %v1136 = vunpack.c.h.b16 %v788
        %v1137 = vunpack.c.l.b16 %v789
        %v1138 = vunpack.c.h.b16 %v789
        %v1139 = vunpack.c.l.b16 %v790
        %v1140 = vunpack.c.h.b16 %v790
        %v1141 = vunpack.c.l.b16 %v791
        %v1142 = vunpack.c.h.b16 %v791
        %v1143 = vunpack.c.l.b16 %v792
        %v1144 = vunpack.c.h.b16 %v792
        %v1145 = vunpack.c.l.b16 %v793
        %v1146 = vunpack.c.h.b16 %v793
        %v1147 = vunpack.c.l.b16 %v794
        %v1148 = vunpack.c.h.b16 %v794
        %v1149 = vunpack.c.l.b16 %v795
        %v1150 = vunpack.c.h.b16 %v795
        %v1151 = vunpack.c.l.b16 %v796
        %v1152 = vunpack.c.h.b16 %v796
        %v1153 = vunpack.c.l.b16 %v797
        %v1154 = vunpack.c.h.b16 %v797
        %v1155 = vunpack.c.l.b16 %v798
        %v1156 = vunpack.c.h.b16 %v798
        %v1157 = vunpack.c.l.b16 %v799
        %v1158 = vunpack.c.h.b16 %v799
        %v1159 = vunpack.c.l.b16 %v800
        %v1160 = vunpack.c.h.b16 %v800
        %v1161 = vunpack.c.l.b16 %v801
        %v1162 = vunpack.c.h.b16 %v801
        %v1163 = vunpack.c.l.b16 %v802
        %v1164 = vunpack.c.h.b16 %v802
        %v1165 = vunpack.c.l.b16 %v803
        %v1166 = vunpack.c.h.b16 %v803
        %v1167 = vunpack.c.l.b16 %v804
        %v1168 = vunpack.c.h.b16 %v804
        %v1169 = vunpack.c.l.b16 %v805
        %v1170 = vunpack.c.h.b16 %v805
        %v1171 = vunpack.c.l.b16 %v806
        %v1172 = vunpack.c.h.b16 %v806
        %v1173 = vunpack.c.l.b16 %v807
        %v1174 = vunpack.c.h.b16 %v807
        %v1175 = vunpack.c.l.b16 %v808
        %v1176 = vunpack.c.h.b16 %v808
        %v1177 = vunpack.c.l.b16 %v809
        %v1178 = vunpack.c.h.b16 %v809
        %v1179 = vunpack.c.l.b16 %v810
        %v1180 = vunpack.c.h.b16 %v810
        %v1181 = vunpack.c.l.b16 %v811
        %v1182 = vunpack.c.h.b16 %v811
        %v1183 = vunpack.c.l.b16 %v812
        %v1184 = vunpack.c.h.b16 %v812
        %v1185 = vunpack.c.l.b16 %v813
        %v1186 = vunpack.c.h.b16 %v813
        %v1187 = vunpack.c.l.b16 %v814
        %v1188 = vunpack.c.h.b16 %v814
        %v1189 = vunpack.c.l.b16 %v815
        %v1190 = vunpack.c.h.b16 %v815
        %v1191 = vunpack.c.l.b16 %v816
        %v1192 = vunpack.c.h.b16 %v816
        %v1193 = vunpack.c.l.b16 %v817
        %v1194 = vunpack.c.h.b16 %v817
        %v1195 = vunpack.c.l.b16 %v818
        %v1196 = vunpack.c.h.b16 %v818
        %v1197 = vunpack.c.l.b16 %v819
        %v1198 = vunpack.c.h.b16 %v819
        %v1199 = vunpack.c.l.b16 %v820
        %v1200 = vunpack.c.h.b16 %v820
        %v1201 = vunpack.c.l.b16 %v821
        %v1202 = vunpack.c.h.b16 %v821
        %v1203 = vunpack.c.l.b16 %v822
        %v1204 = vunpack.c.h.b16 %v822
        %v1205 = vunpack.c.l.b16 %v823
        %v1206 = vunpack.c.h.b16 %v823
        %v1207 = vunpack.c.l.b16 %v824
        %v1208 = vunpack.c.h.b16 %v824
        %v1209 = vunpack.c.l.b16 %v825
        %v1210 = vunpack.c.h.b16 %v825
        %v1211 = vunpack.c.l.b16 %v826
        %v1212 = vunpack.c.h.b16 %v826
        %v1213 = vunpack.c.l.b16 %v827
        %v1214 = vunpack.c.h.b16 %v827
        %v1215 = vunpack.c.l.b16 %v828
        %v1216 = vunpack.c.h.b16 %v828
        %v1217 = vunpack.c.l.b16 %v829
        %v1218 = vunpack.c.h.b16 %v829
        %v1219 = vunpack.c.l.b16 %v830
        %v1220 = vunpack.c.h.b16 %v830
        %v1221 = vunpack.c.l.b16 %v831
        %v1222 = vunpack.c.h.b16 %v831
        %v1223 = vunpack.c.l.b16 %v832
        %v1224 = vunpack.c.h.b16 %v832
        %v1225 = vunpack.c.l.b16 %v833
        %v1226 = vunpack.c.h.b16 %v833
        %v1227 = vunpack.c.l.b16 %v834
        %v1228 = vunpack.c.h.b16 %v834
        %v1229 = vunpack.c.l.b16 %v835
        %v1230 = vunpack.c.h.b16 %v835
        %v1231 = vunpack.c.l.b16 %v836
        %v1232 = vunpack.c.h.b16 %v836
        %v1233 = vunpack.c.l.b16 %v837
        %v1234 = vunpack.c.h.b16 %v837
        %v1235 = vunpack.c.l.b16 %v838
        %v1236 = vunpack.c.h.b16 %v838
        %v1237 = vunpack.c.l.b16 %v839
        %v1238 = vunpack.c.h.b16 %v839
        %v1239 = vunpack.c.l.b16 %v840
        %v1240 = vunpack.c.h.b16 %v840
        %v1241 = vunpack.c.l.b16 %v841
        %v1242 = vunpack.c.h.b16 %v841
        %v1243 = vunpack.c.l.b16 %v842
        %v1244 = vunpack.c.h.b16 %v842
        %v1245 = vunpack.c.l.b16 %v843
        %v1246 = vunpack.c.h.b16 %v843
        %v1247 = vunpack.c.l.b16 %v844
        %v1248 = vunpack.c.h.b16 %v844
        %v1249 = vunpack.c.l.b16 %v845
        %v1250 = vunpack.c.h.b16 %v845
        %v1251 = vunpack.c.l.b16 %v846
        %v1252 = vunpack.c.h.b16 %v846
        %v1253 = vunpack.c.l.b16 %v847
        %v1254 = vunpack.c.h.b16 %v847
        %v1255 = vunpack.c.l.b16 %v848
        %v1256 = vunpack.c.h.b16 %v848
        %v1257 = vunpack.c.l.b16 %v849
        %v1258 = vunpack.c.h.b16 %v849
        %v1259 = vunpack.c.l.b16 %v850
        %v1260 = vunpack.c.h.b16 %v850
        %v1261 = vunpack.c.l.b16 %v851
        %v1262 = vunpack.c.h.b16 %v851
        %v1263 = vunpack.c.l.b16 %v852
        %v1264 = vunpack.c.h.b16 %v852
        %v1265 = vunpack.c.l.b16 %v853
        %v1266 = vunpack.c.h.b16 %v853
        %v1267 = vunpack.c.l.b16 %v854
        %v1268 = vunpack.c.h.b16 %v854
        %v1269 = vunpack.c.l.b16 %v855
        %v1270 = vunpack.c.h.b16 %v855
        %v1271 = vunpack.c.l.b16 %v856
        %v1272 = vunpack.c.h.b16 %v856
        %v1273 = vunpack.c.l.b16 %v857
        %v1274 = vunpack.c.h.b16 %v857
        %v1275 = vunpack.c.l.b16 %v858
        %v1276 = vunpack.c.h.b16 %v858
        %v1277 = vunpack.c.l.b16 %v859
        %v1278 = vunpack.c.h.b16 %v859
        %v1279 = vunpack.c.l.b16 %v860
        %v1280 = vunpack.c.h.b16 %v860
        %v1281 = vunpack.c.l.b16 %v861
        %v1282 = vunpack.c.h.b16 %v861
        %v1283 = vunpack.c.l.b16 %v862
        %v1284 = vunpack.c.h.b16 %v862
        %v1285 = vunpack.c.l.b16 %v863
        %v1286 = vunpack.c.h.b16 %v863
        %v1287 = vunpack.c.l.b16 %v864
        %v1288 = vunpack.c.h.b16 %v864
        %v1289 = vpack.c.b16 %v1035, %v1033
        %v1290 = vpack.c.b16 %v1036, %v1034
        %v1291 = vpack.c.b16 %v1039, %v1037
        %v1292 = vpack.c.b16 %v1040, %v1038
        %v1293 = vpack.c.b16 %v1043, %v1041
        %v1294 = vpack.c.b16 %v1044, %v1042
        %v1295 = vpack.c.b16 %v1047, %v1045
        %v1296 = vpack.c.b16 %v1048, %v1046
        %v1297 = vpack.c.b16 %v1051, %v1049
        %v1298 = vpack.c.b16 %v1052, %v1050
        %v1299 = vpack.c.b16 %v1055, %v1053
        %v1300 = vpack.c.b16 %v1056, %v1054
        %v1301 = vpack.c.b16 %v1059, %v1057
        %v1302 = vpack.c.b16 %v1060, %v1058
        %v1303 = vpack.c.b16 %v1063, %v1061
        %v1304 = vpack.c.b16 %v1064, %v1062
        %v1305 = vpack.c.b16 %v1067, %v1065
        %v1306 = vpack.c.b16 %v1068, %v1066
        %v1307 = vpack.c.b16 %v1071, %v1069
        %v1308 = vpack.c.b16 %v1072, %v1070
        %v1309 = vpack.c.b16 %v1075, %v1073
        %v1310 = vpack.c.b16 %v1076, %v1074
        %v1311 = vpack.c.b16 %v1079, %v1077
        %v1312 = vpack.c.b16 %v1080, %v1078
        %v1313 = vpack.c.b16 %v1083, %v1081
        %v1314 = vpack.c.b16 %v1084, %v1082
        %v1315 = vpack.c.b16 %v1087, %v1085
        %v1316 = vpack.c.b16 %v1088, %v1086
        %v1317 = vpack.c.b16 %v1091, %v1089
        %v1318 = vpack.c.b16 %v1092, %v1090
        %v1319 = vpack.c.b16 %v1095, %v1093
        %v1320 = vpack.c.b16 %v1096, %v1094
        %v1321 = vpack.c.b16 %v1099, %v1097
        %v1322 = vpack.c.b16 %v1100, %v1098
        %v1323 = vpack.c.b16 %v1103, %v1101
        %v1324 = vpack.c.b16 %v1104, %v1102
        %v1325 = vpack.c.b16 %v1107, %v1105
        %v1326 = vpack.c.b16 %v1108, %v1106
        %v1327 = vpack.c.b16 %v1111, %v1109
        %v1328 = vpack.c.b16 %v1112, %v1110
        %v1329 = vpack.c.b16 %v1115, %v1113
        %v1330 = vpack.c.b16 %v1116, %v1114
        %v1331 = vpack.c.b16 %v1119, %v1117
        %v1332 = vpack.c.b16 %v1120, %v1118
        %v1333 = vpack.c.b16 %v1123, %v1121
        %v1334 = vpack.c.b16 %v1124, %v1122
        %v1335 = vpack.c.b16 %v1127, %v1125
        %v1336 = vpack.c.b16 %v1128, %v1126
        %v1337 = vpack.c.b16 %v1131, %v1129
        %v1338 = vpack.c.b16 %v1132, %v1130
        %v1339 = vpack.c.b16 %v1135, %v1133
        %v1340 = vpack.c.b16 %v1136, %v1134
        %v1341 = vpack.c.b16 %v1139, %v1137
        %v1342 = vpack.c.b16 %v1140, %v1138
        %v1343 = vpack.c.b16 %v1143, %v1141
        %v1344 = vpack.c.b16 %v1144, %v1142
        %v1345 = vpack.c.b16 %v1147, %v1145
        %v1346 = vpack.c.b16 %v1148, %v1146
        %v1347 = vpack.c.b16 %v1151, %v1149
        %v1348 = vpack.c.b16 %v1152, %v1150
        %v1349 = vpack.c.b16 %v1155, %v1153
        %v1350 = vpack.c.b16 %v1156, %v1154
        %v1351 = vpack.c.b16 %v1159, %v1157
        %v1352 = vpack.c.b16 %v1160, %v1158
        %v1353 = vpack.c.b16 %v1163, %v1161
        %v1354 = vpack.c.b16 %v1164, %v1162
        %v1355 = vpack.c.b16 %v1167, %v1165
        %v1356 = vpack.c.b16 %v1168, %v1166
        %v1357 = vpack.c.b16 %v1171, %v1169
        %v1358 = vpack.c.b16 %v1172, %v1170
        %v1359 = vpack.c.b16 %v1175, %v1173
        %v1360 = vpack.c.b16 %v1176, %v1174
        %v1361 = vpack.c.b16 %v1179, %v1177
        %v1362 = vpack.c.b16 %v1180, %v1178
        %v1363 = vpack.c.b16 %v1183, %v1181
        %v1364 = vpack.c.b16 %v1184, %v1182
        %v1365 = vpack.c.b16 %v1187, %v1185
        %v1366 = vpack.c.b16 %v1188, %v1186
        %v1367 = vpack.c.b16 %v1191, %v1189
        %v1368 = vpack.c.b16 %v1192, %v1190
        %v1369 = vpack.c.b16 %v1195, %v1193
        %v1370 = vpack.c.b16 %v1196, %v1194
        %v1371 = vpack.c.b16 %v1199, %v1197
        %v1372 = vpack.c.b16 %v1200, %v1198
        %v1373 = vpack.c.b16 %v1203, %v1201
        %v1374 = vpack.c.b16 %v1204, %v1202
        %v1375 = vpack.c.b16 %v1207, %v1205
        %v1376 = vpack.c.b16 %v1208, %v1206
        %v1377 = vpack.c.b16 %v1211, %v1209
        %v1378 = vpack.c.b16 %v1212, %v1210
        %v1379 = vpack.c.b16 %v1215, %v1213
        %v1380 = vpack.c.b16 %v1216, %v1214
        %v1381 = vpack.c.b16 %v1219, %v1217
        %v1382 = vpack.c.b16 %v1220, %v1218
        %v1383 = vpack.c.b16 %v1223, %v1221
        %v1384 = vpack.c.b16 %v1224, %v1222
        %v1385 = vpack.c.b16 %v1227, %v1225
        %v1386 = vpack.c.b16 %v1228, %v1226
        %v1387 = vpack.c.b16 %v1231, %v1229
        %v1388 = vpack.c.b16 %v1232, %v1230
        %v1389 = vpack.c.b16 %v1235, %v1233
        %v1390 = vpack.c.b16 %v1236, %v1234
        %v1391 = vpack.c.b16 %v1239, %v1237
        %v1392 = vpack.c.b16 %v1240, %v1238
        %v1393 = vpack.c.b16 %v1243, %v1241
        %v1394 = vpack.c.b16 %v1244, %v1242
        %v1395 = vpack.c.b16 %v1247, %v1245
        %v1396 = vpack.c.b16 %v1248, %v1246
        %v1397 = vpack.c.b16 %v1251, %v1249
        %v1398 = vpack.c.b16 %v1252, %v1250
        %v1399 = vpack.c.b16 %v1255, %v1253
        %v1400 = vpack.c.b16 %v1256, %v1254
        %v1401 = vpack.c.b16 %v1259, %v1257
        %v1402 = vpack.c.b16 %v1260, %v1258
        %v1403 = vpack.c.b16 %v1263, %v1261
        %v1404 = vpack.c.b16 %v1264, %v1262
        %v1405 = vpack.c.b16 %v1267, %v1265
        %v1406 = vpack.c.b16 %v1268, %v1266
        %v1407 = vpack.c.b16 %v1271, %v1269
        %v1408 = vpack.c.b16 %v1272, %v1270
        %v1409 = vpack.c.b16 %v1275, %v1273
        %v1410 = vpack.c.b16 %v1276, %v1274
        %v1411 = vpack.c.b16 %v1279, %v1277
        %v1412 = vpack.c.b16 %v1280, %v1278
        %v1413 = vpack.c.b16 %v1283, %v1281
        %v1414 = vpack.c.b16 %v1284, %v1282
        %v1415 = vpack.c.b16 %v1287, %v1285
        %v1416 = vpack.c.b16 %v1288, %v1286
        %1545 = vmatprep.subr.bf16.mxu0 %v1290
        %1546 = vmatpush1.bf16.msra.mxu0 %v1289
        %1547 = vmatprep.subr.bf16.mxu0 %v1292
        %1548 = vmatpush1.bf16.msra.mxu0 %v1291
        %1549 = vmatprep.subr.bf16.mxu0 %v1294
        %1550 = vmatpush1.bf16.msra.mxu0 %v1293
        %1551 = vmatprep.subr.bf16.mxu0 %v1296
        %1552 = vmatpush1.bf16.msra.mxu0 %v1295
        %1553 = vmatprep.subr.bf16.mxu0 %v1298
        %1554 = vmatpush1.bf16.msra.mxu0 %v1297
        %1555 = vmatprep.subr.bf16.mxu0 %v1300
        %1556 = vmatpush1.bf16.msra.mxu0 %v1299
        %1557 = vmatprep.subr.bf16.mxu0 %v1302
        %1558 = vmatpush1.bf16.msra.mxu0 %v1301
        %1559 = vmatprep.subr.bf16.mxu0 %v1304
        %1560 = vmatpush1.bf16.msra.mxu0 %v1303
        %1561 = vmatprep.subr.bf16.mxu0 %v1306
        %1562 = vmatpush1.bf16.msra.mxu0 %v1305
        %1563 = vmatprep.subr.bf16.mxu0 %v1308
        %1564 = vmatpush1.bf16.msra.mxu0 %v1307
        %1565 = vmatprep.subr.bf16.mxu0 %v1310
        %1566 = vmatpush1.bf16.msra.mxu0 %v1309
        %1567 = vmatprep.subr.bf16.mxu0 %v1312
        %1568 = vmatpush1.bf16.msra.mxu0 %v1311
        %1569 = vmatprep.subr.bf16.mxu0 %v1314
        %1570 = vmatpush1.bf16.msra.mxu0 %v1313
        %1571 = vmatprep.subr.bf16.mxu0 %v1316
        %1572 = vmatpush1.bf16.msra.mxu0 %v1315
        %1573 = vmatprep.subr.bf16.mxu0 %v1318
        %1574 = vmatpush1.bf16.msra.mxu0 %v1317
        %1575 = vmatprep.subr.bf16.mxu0 %v1320
        %1576 = vmatpush1.bf16.msra.mxu0 %v1319
        %1577 = vmatprep.mubr.bf16.mxu0 %v890
        %1578 = vmatmul.mubr.bf16.gmra.mrb[0].mxu0 %v889
        %v1579 = vpop.f32.mrb[0].mxu0
        %v1580 = vadd.f32 %v870, %v1579
        %v1581 = vpop.f32.mrb[0].mxu0
        %v1582 = vadd.f32 %v874, %v1581
        %v1583 = vpop.f32.mrb[0].mxu0
        %v1584 = vpop.f32.mrb[0].mxu0
        %1585 = vdwg.mxu0
        %1586 = vmatprep.subr.bf16.mxu0 %v1322
        %1587 = vmatpush1.bf16.msra.mxu0 %v1321
        %1588 = vmatprep.subr.bf16.mxu0 %v1324
        %1589 = vmatpush1.bf16.msra.mxu0 %v1323
        %1590 = vmatprep.subr.bf16.mxu0 %v1326
        %1591 = vmatpush1.bf16.msra.mxu0 %v1325
        %1592 = vmatprep.subr.bf16.mxu0 %v1328
        %1593 = vmatpush1.bf16.msra.mxu0 %v1327
        %1594 = vmatprep.subr.bf16.mxu0 %v1330
        %1595 = vmatpush1.bf16.msra.mxu0 %v1329
        %1596 = vmatprep.subr.bf16.mxu0 %v1332
        %1597 = vmatpush1.bf16.msra.mxu0 %v1331
        %1598 = vmatprep.subr.bf16.mxu0 %v1334
        %1599 = vmatpush1.bf16.msra.mxu0 %v1333
        %1600 = vmatprep.subr.bf16.mxu0 %v1336
        %1601 = vmatpush1.bf16.msra.mxu0 %v1335
        %1602 = vmatprep.subr.bf16.mxu0 %v1338
        %1603 = vmatpush1.bf16.msra.mxu0 %v1337
        %1604 = vmatprep.subr.bf16.mxu0 %v1340
        %1605 = vmatpush1.bf16.msra.mxu0 %v1339
        %1606 = vmatprep.subr.bf16.mxu0 %v1342
        %1607 = vmatpush1.bf16.msra.mxu0 %v1341
        %1608 = vmatprep.subr.bf16.mxu0 %v1344
        %1609 = vmatpush1.bf16.msra.mxu0 %v1343
        %1610 = vmatprep.subr.bf16.mxu0 %v1346
        %1611 = vmatpush1.bf16.msra.mxu0 %v1345
        %1612 = vmatprep.subr.bf16.mxu0 %v1348
        %1613 = vmatpush1.bf16.msra.mxu0 %v1347
        %1614 = vmatprep.subr.bf16.mxu0 %v1350
        %1615 = vmatpush1.bf16.msra.mxu0 %v1349
        %1616 = vmatprep.subr.bf16.mxu0 %v1352
        %1617 = vmatpush1.bf16.msra.mxu0 %v1351
        %1618 = vmatprep.mubr.bf16.mxu0 %v892
        %1619 = vmatmul.mubr.bf16.gmra.mrb[0].mxu0 %v891
        %v1620 = vpop.f32.mrb[0].mxu0
        %v1621 = vadd.f32 %v1580, %v1620
        %v1622 = vpop.f32.mrb[0].mxu0
        %v1623 = vadd.f32 %v1582, %v1622
        %v1624 = vpop.f32.mrb[0].mxu0
        %v1625 = vpop.f32.mrb[0].mxu0
        %1626 = vdwg.mxu0
        %1627 = vmatprep.subr.bf16.mxu0 %v1354
        %1628 = vmatpush1.bf16.msra.mxu0 %v1353
        %1629 = vmatprep.subr.bf16.mxu0 %v1356
        %1630 = vmatpush1.bf16.msra.mxu0 %v1355
        %1631 = vmatprep.subr.bf16.mxu0 %v1358
        %1632 = vmatpush1.bf16.msra.mxu0 %v1357
        %1633 = vmatprep.subr.bf16.mxu0 %v1360
        %1634 = vmatpush1.bf16.msra.mxu0 %v1359
        %1635 = vmatprep.subr.bf16.mxu0 %v1362
        %1636 = vmatpush1.bf16.msra.mxu0 %v1361
        %1637 = vmatprep.subr.bf16.mxu0 %v1364
        %1638 = vmatpush1.bf16.msra.mxu0 %v1363
        %1639 = vmatprep.subr.bf16.mxu0 %v1366
        %1640 = vmatpush1.bf16.msra.mxu0 %v1365
        %1641 = vmatprep.subr.bf16.mxu0 %v1368
        %1642 = vmatpush1.bf16.msra.mxu0 %v1367
        %1643 = vmatprep.subr.bf16.mxu0 %v1370
        %1644 = vmatpush1.bf16.msra.mxu0 %v1369
        %1645 = vmatprep.subr.bf16.mxu0 %v1372
        %1646 = vmatpush1.bf16.msra.mxu0 %v1371
        %1647 = vmatprep.subr.bf16.mxu0 %v1374
        %1648 = vmatpush1.bf16.msra.mxu0 %v1373
        %1649 = vmatprep.subr.bf16.mxu0 %v1376
        %1650 = vmatpush1.bf16.msra.mxu0 %v1375
        %1651 = vmatprep.subr.bf16.mxu0 %v1378
        %1652 = vmatpush1.bf16.msra.mxu0 %v1377
        %1653 = vmatprep.subr.bf16.mxu0 %v1380
        %1654 = vmatpush1.bf16.msra.mxu0 %v1379
        %1655 = vmatprep.subr.bf16.mxu0 %v1382
        %1656 = vmatpush1.bf16.msra.mxu0 %v1381
        %1657 = vmatprep.subr.bf16.mxu0 %v1384
        %1658 = vmatpush1.bf16.msra.mxu0 %v1383
        %1659 = vmatprep.mubr.bf16.mxu0 %v894
        %1660 = vmatmul.mubr.bf16.gmra.mrb[0].mxu0 %v893
        %v1661 = vpop.f32.mrb[0].mxu0
        %v1662 = vadd.f32 %v1621, %v1661
        %v1663 = vpop.f32.mrb[0].mxu0
        %v1664 = vadd.f32 %v1623, %v1663
        %v1665 = vpop.f32.mrb[0].mxu0
        %v1666 = vpop.f32.mrb[0].mxu0
        %1667 = vdwg.mxu0
        %1668 = vmatprep.subr.bf16.mxu0 %v1386
        %1669 = vmatpush1.bf16.msra.mxu0 %v1385
        %1670 = vmatprep.subr.bf16.mxu0 %v1388
        %1671 = vmatpush1.bf16.msra.mxu0 %v1387
        %1672 = vmatprep.subr.bf16.mxu0 %v1390
        %1673 = vmatpush1.bf16.msra.mxu0 %v1389
        %1674 = vmatprep.subr.bf16.mxu0 %v1392
        %1675 = vmatpush1.bf16.msra.mxu0 %v1391
        %1676 = vmatprep.subr.bf16.mxu0 %v1394
        %1677 = vmatpush1.bf16.msra.mxu0 %v1393
        %1678 = vmatprep.subr.bf16.mxu0 %v1396
        %1679 = vmatpush1.bf16.msra.mxu0 %v1395
        %1680 = vmatprep.subr.bf16.mxu0 %v1398
        %1681 = vmatpush1.bf16.msra.mxu0 %v1397
        %1682 = vmatprep.subr.bf16.mxu0 %v1400
        %1683 = vmatpush1.bf16.msra.mxu0 %v1399
        %1684 = vmatprep.subr.bf16.mxu0 %v1402
        %1685 = vmatpush1.bf16.msra.mxu0 %v1401
        %1686 = vmatprep.subr.bf16.mxu0 %v1404
        %1687 = vmatpush1.bf16.msra.mxu0 %v1403
        %1688 = vmatprep.subr.bf16.mxu0 %v1406
        %1689 = vmatpush1.bf16.msra.mxu0 %v1405
        %1690 = vmatprep.subr.bf16.mxu0 %v1408
        %1691 = vmatpush1.bf16.msra.mxu0 %v1407
        %1692 = vmatprep.subr.bf16.mxu0 %v1410
        %1693 = vmatpush1.bf16.msra.mxu0 %v1409
        %1694 = vmatprep.subr.bf16.mxu0 %v1412
        %1695 = vmatpush1.bf16.msra.mxu0 %v1411
        %1696 = vmatprep.subr.bf16.mxu0 %v1414
        %1697 = vmatpush1.bf16.msra.mxu0 %v1413
        %1698 = vmatprep.subr.bf16.mxu0 %v1416
        %1699 = vmatpush1.bf16.msra.mxu0 %v1415
        %1700 = vmatprep.mubr.bf16.mxu0 %v896
        %1701 = vmatmul.mubr.bf16.gmra.mrb[0].mxu0 %v895
        %v1702 = vpop.f32.mrb[0].mxu0
        %v1703 = vadd.f32 %v1662, %v1702
        %v1704 = vpop.f32.mrb[0].mxu0
        %v1705 = vadd.f32 %v1664, %v1704
        %v1706 = vpop.f32.mrb[0].mxu0
        %v1707 = vpop.f32.mrb[0].mxu0
        %1708 = vdwg.mxu0
        %v1709 = vmax.f32 %v1703, 0.0
        %v1710 = vmax.f32 %v1705, 0.0
        %1711 = vst [vmem:[%s725] sm:$0xff] %v1709
        %1712 = vst [vmem:[%s725 + $0x8] sm:$0xff] %v1710
        %s1713 = sand.u32 %s98, 1
        %s1714 = scalar_lea.sflag [#allocation4], %s1713
        %s1715 = sand.u32 %s98, 1
        %s1716 = smul.addr %s1715, 16
        %s1717 = scalar_lea.vmem [#allocation3], %s1716
        // Predicated region
        $region71: #{simple_nn_forward.1} parent=65 // pred_check
          %p1718 = pneg %p108
        $region72: #{simple_nn_forward.1} parent=65 // pred_check_branch
          %1720 = sbr.rel (%p1718) target = $region74
        $region73: #{simple_nn_forward.1} parent=65 // pred_region
          %s1721 = smul.u32 2, %s17
          %s1723 = ssub.s32 256, 256
          %1724 = vsyncadd %s1714, %s1723
          %s1725 = smul.addr %s1721, 128
          %s1726 = scalar_lea.hbm %s3, %s1725
          %s1728 = sshll.u32 %s1717, 4
          %s1729 = int_to_ptr.vmem [resolvable:$true] %s1728
          %1731 = dma.vmem_to_hbm [thread:$0]  %s1729, 256, %s1726, %s1714
        $region74: #{simple_nn_forward.1} parent=65 // pred_fallthru
          _
      $region66: #{simple_nn_forward.1} parent=5 // pred_fallthru
        _
      %p1732 = scmp.le.s32.totalorder 2, %s12
      // Predicated region
      $region75: #{simple_nn_forward.1} parent=5 // pred_check
        %p1733 = pneg %p1732
      $region76: #{simple_nn_forward.1} parent=5 // pred_check_branch
        %1735 = sbr.rel (%p1733) target = $region78
      $region77: #{simple_nn_forward.1} parent=5 // pred_region
        %s1736 = ssub.s32 %s12, 2
        // Predicated region
        $region79: #{simple_nn_forward.1} parent=77 // pred_check
          %p1737 = pneg %p114
        $region80: #{simple_nn_forward.1} parent=77 // pred_check_branch
          %1739 = sbr.rel (%p1737) target = $region82
        $region81: #{simple_nn_forward.1} parent=77 // pred_region
          %s1740 = sand.u32 %s99, 1
          %s1741 = scalar_lea.sflag [#allocation4], %s1740
          %s1742 = sand.u32 %s99, 1
          %s1743 = smul.addr %s1742, 16
          %s1744 = scalar_lea.vmem [#allocation3], %s1743
          %1745 = dma.done %s1741, 256
        $region82: #{simple_nn_forward.1} parent=77 // pred_fallthru
          _
      $region78: #{simple_nn_forward.1} parent=5 // pred_fallthru
        _
    $region6: #{simple_nn_forward.1} parent=1 // loop_footer
      %s16 = sadd.s32 1, %s12
    $region7: #{simple_nn_forward.1} parent=1 // loop_footer_branch
      %11 = sbr.rel target = $region3
    $region8: #{simple_nn_forward.1} parent=1 // loop_exit
      _
    %1746 = vsyncpa [#allocation4], 1
    %s1747 = scalar_lea.sflag [#allocation4], 1
    %1748 = vsyncpa %s1747, 1

</llo_original>
